<compile_context>
chip_gen: v6e
topology: v6e:2x2x1
jax: 0.10.0
libtpu: 0.0.40
codegen_flags: <defaults>
</compile_context>

<pallas_src>
import functools

import jax
import jax.numpy as jnp
from jax.experimental import pallas as pl
from jax.experimental.pallas import tpu as pltpu


def _softmax_expectation(scores, delta, n):
    """E[index - delta] under softmax(scores, axis=-1).

    scores: (T, n) f32 with pixels in sublanes.  Returns (T, 1) f32.
    Stabilized like torch.nn.Softmax (subtract the per-pixel max).
    """
    m = jnp.max(scores, axis=-1, keepdims=True)                  # (T, 1)
    p = jnp.exp(scores - m)                                      # (T, n)
    den = jnp.sum(p, axis=-1, keepdims=True)                     # (T, 1)
    coord = (jax.lax.broadcasted_iota(jnp.int32, (1, n), 1)
             .astype(jnp.float32) - float(delta))                # (1, n)
    num = jnp.sum(p * coord, axis=-1, keepdims=True)             # (T, 1)
    return num / den


def _displacement_kernel(cv_ref, out_ref, *, inv_tau, delta_w, delta_h,
                         n_dh, n_dw):
    # cv_ref block : (1, T, Dh*Dw)  -- natural contiguous layout, no transpose
    # out_ref block: (1, T, 2)      -- [:, :, 0] = v_x, [:, :, 1] = v_y
    x = cv_ref[0].astype(jnp.float32)            # (T, D); no-op for f32 inputs
    e = jnp.exp(x * inv_tau)                     # (T, D)   (matches reference;
                                                 #  may overflow like PyTorch)

    # chunks[h] = exp-volume lanes with dh == h  ->  (T, Dw) each.
    chunks = [e[:, h * n_dw:(h + 1) * n_dw] for h in range(n_dh)]

    # x displacement: marginalize over dh (lane-slice adds, exact f32).
    s_i = chunks[0]
    for c in chunks[1:]:
        s_i = s_i + c                                            # (T, Dw)

    # y displacement: marginalize over dw (per-chunk lane sums), assembled
    # along lanes -- no scratch round-trip, no masked single-sublane stores.
    s_j = jnp.concatenate(
        [jnp.sum(c, axis=-1, keepdims=True) for c in chunks], axis=-1)  # (T, Dh)

    v_x = _softmax_expectation(s_i, delta_w, n_dw)               # (T, 1)
    v_y = _softmax_expectation(s_j, delta_h, n_dh)               # (T, 1)
    out_ref[0] = jnp.concatenate([v_x, v_y], axis=-1)            # single store


def _pick_tile(hw, batch, max_tile):
    """Largest multiple-of-8 tile <= cap that divides hw.

    cap is halved when batch == 1 so the grid always has >= 2 steps (both v7x
    TensorCores get work).  If no divisor exists the caller pads HW up to a
    tile multiple (no full-HW escape hatch).
    """
    cap = min(max_tile, hw)
    if batch == 1 and hw >= 16:
        cap = min(cap, hw // 2)
    cap = max(8, (cap // 8) * 8)
    for t in range(cap, 7, -8):
        if hw % t == 0:
            return t
    return cap


def displacement_map(cost_volume, *, delta_w=2, delta_h=2, tau=1.0,
                     max_tile=1024):
    """Pallas implementation of DisplacementMap.forward (tau != 0 branch)."""
    # TODO(synk): tau == 0 branch (argmax-based integer displacement) not implemented.
    assert tau != 0
    b, h, w, n_dh, n_dw = cost_volume.shape
    assert n_dh == 2 * delta_h + 1 and n_dw == 2 * delta_w + 1
    hw = h * w
    d = n_dh * n_dw

    tile = _pick_tile(hw, b, max_tile)
    hw_pad = ((hw + tile - 1) // tile) * tile
    n_tiles = hw_pad // tile

    cv = cost_volume.reshape(b, hw, d)           # free contiguous view
    if hw_pad != hw:
        # Zero padding: exp(0)=1 -> uniform softmax -> displacement 0; cropped below.
        cv = jnp.pad(cv, ((0, 0), (0, hw_pad - hw), (0, 0)))

    kernel = functools.partial(
        _displacement_kernel, inv_tau=1.0 / float(tau),
        delta_w=delta_w, delta_h=delta_h, n_dh=n_dh, n_dw=n_dw)

    cost = pl.CostEstimate(
        flops=int(b * hw_pad * (3 * d + 8 * (n_dw + n_dh))),
        transcendentals=int(b * hw_pad * (d + n_dw + n_dh)),
        bytes_accessed=int(cv.size * cv.dtype.itemsize + b * hw_pad * 2 * 4))

    out = pl.pallas_call(
        kernel,
        out_shape=jax.ShapeDtypeStruct((b, hw_pad, 2), jnp.float32),
        grid=(b, n_tiles),
        in_specs=[pl.BlockSpec((1, tile, d), lambda bi, si: (bi, si, 0))],
        out_specs=pl.BlockSpec((1, tile, 2), lambda bi, si: (bi, si, 0)),
        compiler_params=pltpu.CompilerParams(
            dimension_semantics=("parallel", "parallel")),
        cost_estimate=cost,
    )(cv)

    out = out[:, :hw, :]                         # crop padded pixels
    # (B, HW, 2) -> (B, 2, H, W): tiny (8 B/pixel) output-layout pass in XLA.
    return jnp.transpose(out.reshape(b, h, w, 2), (0, 3, 1, 2))


def displacement_map_ref(cost_volume, *, delta_w=2, delta_h=2, tau=1.0):
    """Pure-JAX reference mirroring the PyTorch code (tau != 0 branch)."""
    cv = jnp.exp(cost_volume.astype(jnp.float32) / tau)
    rou_i = jax.nn.softmax(cv.sum(axis=3), axis=3)   # (B,H,W,Dw): softmax over dw
    rou_j = jax.nn.softmax(cv.sum(axis=4), axis=3)   # (B,H,W,Dh): softmax over dh
    ax = jnp.arange(-delta_w, delta_w + 1, dtype=jnp.float32)
    ay = jnp.arange(-delta_h, delta_h + 1, dtype=jnp.float32)
    v_x = (rou_i * ax).sum(axis=3)                   # (B,H,W)
    v_y = (rou_j * ay).sum(axis=3)                   # (B,H,W)
    return jnp.stack([v_x, v_y], axis=1)             # (B,2,H,W)


if __name__ == "__main__":
    delta_w, delta_h, tau = 2, 2, 1.0
    n_dh, n_dw = 2 * delta_h + 1, 2 * delta_w + 1

    key = jax.random.PRNGKey(0)
    # (2,16,16): baseline; (1,24,32): batch==1 split into >=2 tiles (megacore);
    # (1,10,13): non-aligned H*W exercises the padding path.
    for (bsz, hh, ww) in ((2, 16, 16), (1, 24, 32), (1, 10, 13)):
        key, sub_key = jax.random.split(key)
        cost_volume = jax.random.normal(
            sub_key, (bsz, hh, ww, n_dh, n_dw), dtype=jnp.float32)

        out = jax.block_until_ready(
            displacement_map(cost_volume, delta_w=delta_w, delta_h=delta_h,
                             tau=tau))
        ref = displacement_map_ref(cost_volume, delta_w=delta_w,
                                   delta_h=delta_h, tau=tau)

        assert out.shape == (bsz, 2, hh, ww)
        assert jnp.allclose(out, ref, atol=1e-4, rtol=1e-4), (
            f"mismatch vs reference for shape {(bsz, hh, ww)}: "
            f"max abs err {float(jnp.max(jnp.abs(out - ref)))}")

    print("KERNEL_OK")
</pallas_src>

<mosaic_0001>
module attributes {stable_mosaic.version = 11 : i64} {
  func.func @_displacement_kernel(%arg0: i32, %arg1: i32, %arg2: memref<1x256x25xf32, #tpu.memory_space<vmem>>, %arg3: memref<1x256x2xf32, #tpu.memory_space<vmem>>) attributes {dimension_semantics = [#tpu.dimension_semantics<parallel>, #tpu.dimension_semantics<parallel>], iteration_bounds = array<i64: 2, 1>, scalar_prefetch = 0 : i64, scratch_operands = 0 : i64, tpu.core_type = #tpu.core_type<tc>, window_params = [{transform_indices = @transform_0, window_bounds = array<i64: 1, 256, 25>}, {transform_indices = @transform_1, window_bounds = array<i64: 1, 256, 2>}]} {
    %c0 = arith.constant 0 : index
    %c0_0 = arith.constant 0 : index
    %c0_1 = arith.constant 0 : index
    %0 = vector.load %arg2[%c0, %c0_0, %c0_1] : memref<1x256x25xf32, #tpu.memory_space<vmem>>, vector<1x256x25xf32>
    %1 = vector.shape_cast %0 : vector<1x256x25xf32> to vector<256x25xf32>
    %cst = arith.constant 1.000000e+00 : f32
    %2 = vector.broadcast %cst : f32 to vector<256x25xf32>
    %3 = arith.mulf %1, %2 : vector<256x25xf32>
    %4 = math.exp %3 : vector<256x25xf32>
    %5 = vector.extract_strided_slice %4 {offsets = [0, 0], sizes = [256, 5], strides = [1, 1]} : vector<256x25xf32> to vector<256x5xf32>
    %6 = vector.extract_strided_slice %4 {offsets = [0, 5], sizes = [256, 5], strides = [1, 1]} : vector<256x25xf32> to vector<256x5xf32>
    %7 = vector.extract_strided_slice %4 {offsets = [0, 10], sizes = [256, 5], strides = [1, 1]} : vector<256x25xf32> to vector<256x5xf32>
    %8 = vector.extract_strided_slice %4 {offsets = [0, 15], sizes = [256, 5], strides = [1, 1]} : vector<256x25xf32> to vector<256x5xf32>
    %9 = vector.extract_strided_slice %4 {offsets = [0, 20], sizes = [256, 5], strides = [1, 1]} : vector<256x25xf32> to vector<256x5xf32>
    %10 = arith.addf %5, %6 : vector<256x5xf32>
    %11 = arith.addf %10, %7 : vector<256x5xf32>
    %12 = arith.addf %11, %8 : vector<256x5xf32>
    %13 = arith.addf %12, %9 : vector<256x5xf32>
    %cst_2 = arith.constant dense<0.000000e+00> : vector<256xf32>
    %14 = vector.multi_reduction <add>, %5, %cst_2 [1] : vector<256x5xf32> to vector<256xf32>
    %15 = vector.shape_cast %14 : vector<256xf32> to vector<256x1xf32>
    %cst_3 = arith.constant dense<0.000000e+00> : vector<256xf32>
    %16 = vector.multi_reduction <add>, %6, %cst_3 [1] : vector<256x5xf32> to vector<256xf32>
    %17 = vector.shape_cast %16 : vector<256xf32> to vector<256x1xf32>
    %cst_4 = arith.constant dense<0.000000e+00> : vector<256xf32>
    %18 = vector.multi_reduction <add>, %7, %cst_4 [1] : vector<256x5xf32> to vector<256xf32>
    %19 = vector.shape_cast %18 : vector<256xf32> to vector<256x1xf32>
    %cst_5 = arith.constant dense<0.000000e+00> : vector<256xf32>
    %20 = vector.multi_reduction <add>, %8, %cst_5 [1] : vector<256x5xf32> to vector<256xf32>
    %21 = vector.shape_cast %20 : vector<256xf32> to vector<256x1xf32>
    %cst_6 = arith.constant dense<0.000000e+00> : vector<256xf32>
    %22 = vector.multi_reduction <add>, %9, %cst_6 [1] : vector<256x5xf32> to vector<256xf32>
    %23 = vector.shape_cast %22 : vector<256xf32> to vector<256x1xf32>
    %24 = tpu.concatenate %15, %17, %19, %21, %23 in 1 : vector<256x1xf32>, vector<256x1xf32>, vector<256x1xf32>, vector<256x1xf32>, vector<256x1xf32> -> vector<256x5xf32>
    %cst_7 = arith.constant dense<0xFF800000> : vector<256xf32>
    %25 = vector.multi_reduction <maximumf>, %13, %cst_7 [1] : vector<256x5xf32> to vector<256xf32>
    %26 = vector.shape_cast %25 : vector<256xf32> to vector<256x1xf32>
    %27 = vector.broadcast %26 : vector<256x1xf32> to vector<256x5xf32>
    %28 = arith.subf %13, %27 : vector<256x5xf32>
    %29 = math.exp %28 : vector<256x5xf32>
    %cst_8 = arith.constant dense<0.000000e+00> : vector<256xf32>
    %30 = vector.multi_reduction <add>, %29, %cst_8 [1] : vector<256x5xf32> to vector<256xf32>
    %31 = vector.shape_cast %30 : vector<256xf32> to vector<256x1xf32>
    %32 = tpu.iota {dimensions = array<i32: 1>} : vector<1x5xi32>
    %33 = arith.sitofp %32 : vector<1x5xi32> to vector<1x5xf32>
    %cst_9 = arith.constant 2.000000e+00 : f32
    %34 = vector.broadcast %cst_9 : f32 to vector<1x5xf32>
    %35 = arith.subf %33, %34 : vector<1x5xf32>
    %36 = vector.broadcast %35 : vector<1x5xf32> to vector<256x5xf32>
    %37 = arith.mulf %29, %36 : vector<256x5xf32>
    %cst_10 = arith.constant dense<0.000000e+00> : vector<256xf32>
    %38 = vector.multi_reduction <add>, %37, %cst_10 [1] : vector<256x5xf32> to vector<256xf32>
    %39 = vector.shape_cast %38 : vector<256xf32> to vector<256x1xf32>
    %40 = arith.divf %39, %31 : vector<256x1xf32>
    %cst_11 = arith.constant dense<0xFF800000> : vector<256xf32>
    %41 = vector.multi_reduction <maximumf>, %24, %cst_11 [1] : vector<256x5xf32> to vector<256xf32>
    %42 = vector.shape_cast %41 : vector<256xf32> to vector<256x1xf32>
    %43 = vector.broadcast %42 : vector<256x1xf32> to vector<256x5xf32>
    %44 = arith.subf %24, %43 : vector<256x5xf32>
    %45 = math.exp %44 : vector<256x5xf32>
    %cst_12 = arith.constant dense<0.000000e+00> : vector<256xf32>
    %46 = vector.multi_reduction <add>, %45, %cst_12 [1] : vector<256x5xf32> to vector<256xf32>
    %47 = vector.shape_cast %46 : vector<256xf32> to vector<256x1xf32>
    %48 = tpu.iota {dimensions = array<i32: 1>} : vector<1x5xi32>
    %49 = arith.sitofp %48 : vector<1x5xi32> to vector<1x5xf32>
    %cst_13 = arith.constant 2.000000e+00 : f32
    %50 = vector.broadcast %cst_13 : f32 to vector<1x5xf32>
    %51 = arith.subf %49, %50 : vector<1x5xf32>
    %52 = vector.broadcast %51 : vector<1x5xf32> to vector<256x5xf32>
    %53 = arith.mulf %45, %52 : vector<256x5xf32>
    %cst_14 = arith.constant dense<0.000000e+00> : vector<256xf32>
    %54 = vector.multi_reduction <add>, %53, %cst_14 [1] : vector<256x5xf32> to vector<256xf32>
    %55 = vector.shape_cast %54 : vector<256xf32> to vector<256x1xf32>
    %56 = arith.divf %55, %47 : vector<256x1xf32>
    %57 = tpu.concatenate %40, %56 in 1 : vector<256x1xf32>, vector<256x1xf32> -> vector<256x2xf32>
    %c0_15 = arith.constant 0 : index
    %c0_16 = arith.constant 0 : index
    %c0_17 = arith.constant 0 : index
    %58 = vector.load %arg3[%c0_15, %c0_16, %c0_17] : memref<1x256x2xf32, #tpu.memory_space<vmem>>, vector<1x256x2xf32>
    %59 = vector.shape_cast %58 : vector<1x256x2xf32> to vector<256x2xf32>
    %60 = vector.shape_cast %57 : vector<256x2xf32> to vector<1x256x2xf32>
    tpu.vector_store %arg3[%c0_15, %c0_16, %c0_17], %60 {strides = array<i32>} : memref<1x256x2xf32, #tpu.memory_space<vmem>>, vector<1x256x2xf32>,
    return
  }
  func.func @transform_0(%arg0: i32, %arg1: i32) -> (i32, i32, i32) {
    %c0_i32 = arith.constant 0 : i32
    %c0_i32_0 = arith.constant 0 : i32
    return %arg0, %arg1, %c0_i32 : i32, i32, i32
  }
  func.func @transform_1(%arg0: i32, %arg1: i32) -> (i32, i32, i32) {
    %c0_i32 = arith.constant 0 : i32
    %c0_i32_0 = arith.constant 0 : i32
    return %arg0, %arg1, %c0_i32 : i32, i32, i32
  }
}

</mosaic_0001>

<llo_original>
// kernel: tpu_custom_call.1
$region0: #{tpu_custom_call.1}
  #allocation0 [shape = 'u32[]', space=smem, size = 0x4, offset = 0x4, fixed_abs, tag = 'smem constant byte address 0x4 - core index']
  #allocation1 [shape = 'u32[144,128]{1,0:T(1,128)}', space=vmem, size = 0x12000, scoped, tag = 'internal scratch']
  %s0 = inlined_call_operand.vmem [shape: f32[2,256,25], index: 0, kind: input, shape index: {}]
  %s1 = inlined_call_operand.vmem [shape: f32[2,256,2], index: 1, kind: output, shape index: {}]
  %s2 = sld [smem:[#allocation0]]
  $region37: #{tpu_custom_call.1} parent=0
    _
  %s4 = ssub.s32 1, %s2
  %s5 = scalar_select 0, %s4, %s2
  loop: start=0, step=1, limit=4
  $region2: #{tpu_custom_call.1} parent=0 // loop_pre_header
    _
  $region3: #{tpu_custom_call.1} parent=0 // loop_header
    %s7 = sphi 0, %s11
    %p8 = scmp.ge.s32.totalorder %s7, 4
    %s14 = sphi 0, %s26
    %s15 = sphi 0, %s22
    %s16 = sphi 0, %s14
    %s17 = sphi 0, %s15
    %s18 = sphi 0, %s16
    %s19 = sphi 0, %s17
    %s31 = sphi 0, %s33
    %s34 = sphi 0, %s31
    %s35 = sphi 0, %s34
    %s51 = sphi 0, %s35
    %s59 = sphi 0, %s61
    %s62 = sphi 0, %s59
    %s63 = sphi 0, %s62
    %s79 = sphi 0, %s63
  $region4: #{tpu_custom_call.1} parent=0 // loop_header_branch
    %10 = sbr.rel (%p8) target = $region8
  $region5: #{tpu_custom_call.1} parent=0 // loop_body
    %s12 = ssub.s32 %s7, 1
    %s13 = ssub.s32 %s7, 2
    %s20 = sadd.s32 1, %s15
    %p21 = scmp.ge.s32.totalorder %s20, 1
    %s22 = scalar_select %p21, 0, %s20
    %s23 = sadd.s32 1, %s14
    %s24 = scalar_select %p21, %s23, %s14
    %p25 = scmp.ge.s32.totalorder %s24, 2
    %s26 = scalar_select %p25, 0, %s24
    %s27 = ssub.s32 %s14, %s26
    %s28 = ssub.s32 %s15, %s22
    %s29 = sor.u32 %s27, %s28
    %p30 = scmp.eq.s32.totalorder %s29, 0
    %s32 = sadd.s32 %s31, 1
    %s33 = scalar_select %p30, %s31, %s32
    %p36 = pneg %p30
    %p37 = scmp.eq.s32.totalorder %s7, 1
    %p38 = por %p36, %p37
    %p39 = scmp.ne.s32.totalorder %s31, %s34
    %p40 = scmp.eq.s32.totalorder %s7, 0
    %p41 = por %p39, %p40
    %p42 = scmp.ne.s32.totalorder %s31, %s34
    %p43 = scmp.eq.s32.totalorder %s12, 1
    %p44 = por %p42, %p43
    %p45 = scmp.ne.s32.totalorder %s34, %s35
    %p46 = scmp.eq.s32.totalorder %s12, 0
    %p47 = por %p45, %p46
    %p48 = scmp.ne.s32.totalorder %s34, %s35
    %p49 = scmp.eq.s32.totalorder %s13, 1
    %p50 = por %p48, %p49
    %p52 = scmp.ne.s32.totalorder %s35, %s51
    %p53 = scmp.eq.s32.totalorder %s13, 0
    %p54 = por %p52, %p53
    %s55 = ssub.s32 %s14, %s26
    %s56 = ssub.s32 %s15, %s22
    %s57 = sor.u32 %s55, %s56
    %p58 = scmp.eq.s32.totalorder %s57, 0
    %s60 = sadd.s32 %s59, 1
    %s61 = scalar_select %p58, %s59, %s60
    %p64 = pneg %p58
    %p65 = scmp.eq.s32.totalorder %s7, 1
    %p66 = por %p64, %p65
    %p67 = scmp.ne.s32.totalorder %s59, %s62
    %p68 = scmp.eq.s32.totalorder %s7, 0
    %p69 = por %p67, %p68
    %p70 = scmp.ne.s32.totalorder %s59, %s62
    %p71 = scmp.eq.s32.totalorder %s12, 1
    %p72 = por %p70, %p71
    %p73 = scmp.ne.s32.totalorder %s62, %s63
    %p74 = scmp.eq.s32.totalorder %s12, 0
    %p75 = por %p73, %p74
    %p76 = scmp.ne.s32.totalorder %s62, %s63
    %p77 = scmp.eq.s32.totalorder %s13, 1
    %p78 = por %p76, %p77
    %p80 = scmp.ne.s32.totalorder %s63, %s79
    %p81 = scmp.eq.s32.totalorder %s13, 0
    %p82 = por %p80, %p81
    %p83 = scmp.le.s32.totalorder 1, %s7
    %p84 = scmp.lt.s32.totalorder %s7, 3
    %p85 = pnand %p83, %p84
    %p86 = pneg %p85
    // Predicated region
    $region9: #{tpu_custom_call.1} parent=5 // pred_check
      _
    $region10: #{tpu_custom_call.1} parent=5 // pred_check_branch
      %88 = sbr.rel (%p85) target = $region12
    $region11: #{tpu_custom_call.1} parent=5 // pred_region
      %s89 = ssub.s32 %s7, 1
    $region12: #{tpu_custom_call.1} parent=5 // pred_fallthru
      _
    %p90 = scmp.lt.s32.totalorder %s7, 2
    // Predicated region
    $region13: #{tpu_custom_call.1} parent=5 // pred_check
      %p91 = pneg %p90
    $region14: #{tpu_custom_call.1} parent=5 // pred_check_branch
      %93 = sbr.rel (%p91) target = $region16
    $region15: #{tpu_custom_call.1} parent=5 // pred_region
      // Predicated region
      $region17: #{tpu_custom_call.1} parent=15 // pred_check
        %p94 = pneg %p41
      $region18: #{tpu_custom_call.1} parent=15 // pred_check_branch
        %96 = sbr.rel (%p94) target = $region20
      $region19: #{tpu_custom_call.1} parent=15 // pred_region
        %s97 = smul.u32 32, %s15
        %p98 = scmp.lt.s32.totalorder %s14, 1
        %s99 = scalar_select %p98, %s14, 1
        %p100 = scmp.lt.s32.totalorder %s97, 31
        %s101 = scalar_select %p100, %s97, 31
        %s102 = smul.addr %s99, 32
        %s103 = sadd.s32 %s101, %s102
        %s104 = smul.addr %s103, 8
        %s105 = scalar_lea.vmem %s0, %s104
        %s106 = smul.u32 32, %s15
      $region20: #{tpu_custom_call.1} parent=15 // pred_fallthru
        _
    $region16: #{tpu_custom_call.1} parent=5 // pred_fallthru
      _
    %p107 = scmp.le.s32.totalorder 1, %s7
    %p108 = scmp.lt.s32.totalorder %s7, 3
    %p109 = pnand %p107, %p108
    %p110 = pneg %p109
    // Predicated region
    $region21: #{tpu_custom_call.1} parent=5 // pred_check
      _
    $region22: #{tpu_custom_call.1} parent=5 // pred_check_branch
      %112 = sbr.rel (%p109) target = $region24
    $region23: #{tpu_custom_call.1} parent=5 // pred_region
      %s113 = ssub.s32 %s7, 1
      %s114 = smul.u32 32, %s17
      %p115 = scmp.lt.s32.totalorder %s16, 1
      %s116 = scalar_select %p115, %s16, 1
      %p117 = scmp.lt.s32.totalorder %s114, 31
      %s118 = scalar_select %p117, %s114, 31
      %s119 = smul.addr %s116, 32
      %s120 = sadd.s32 %s118, %s119
      %s121 = smul.addr %s120, 8
      %s122 = scalar_lea.vmem %s0, %s121
      %p123 = pneg %p47
      %p124 = pneg %p44
      %p125 = pneg %p75
      %p126 = pneg %p72
      %s127 = smul.u32 32, %s17
      %p128 = scmp.lt.s32.totalorder %s16, 1
      %s129 = scalar_select %p128, %s16, 1
      %p130 = scmp.lt.s32.totalorder %s127, 31
      %s131 = scalar_select %p130, %s127, 31
      %s132 = smul.addr %s129, 32
      %s133 = sadd.s32 %s131, %s132
      %s134 = smul.addr %s133, 8
      %s135 = scalar_lea.vmem %s1, %s134
      %s136 = smul.u32 32, %s17
      %p137 = scmp.lt.s32.totalorder %s16, 1
      %s138 = scalar_select %p137, %s16, 1
      %p139 = scmp.lt.s32.totalorder %s136, 31
      %s140 = scalar_select %p139, %s136, 31
      %s141 = smul.addr %s138, 32
      %s142 = sadd.s32 %s140, %s141
      %s143 = smul.addr %s142, 8
      %s144 = scalar_lea.vmem %s0, %s143
      %s145 = smul.u32 32, %s17
      %s146 = smul.u32 32, %s17
      %p147 = scmp.lt.s32.totalorder %s16, 1
      %s148 = scalar_select %p147, %s16, 1
      %p149 = scmp.lt.s32.totalorder %s146, 31
      %s150 = scalar_select %p149, %s146, 31
      %s151 = smul.addr %s148, 32
      %s152 = sadd.s32 %s150, %s151
      %s153 = smul.addr %s152, 8
      %s154 = scalar_lea.vmem %s1, %s153
      %s155 = smul.u32 32, %s17
      %v156 = vld [vmem:[%s144] sm:$0xff]
      %v157 = vld [vmem:[%s144 + $0x8] sm:$0xff]
      %v158 = vld [vmem:[%s144 + $0x10] sm:$0xff]
      %v159 = vld [vmem:[%s144 + $0x18] sm:$0xff]
      %v160 = vld [vmem:[%s144 + $0x20] sm:$0xff]
      %v161 = vld [vmem:[%s144 + $0x28] sm:$0xff]
      %v162 = vld [vmem:[%s144 + $0x30] sm:$0xff]
      %v163 = vld [vmem:[%s144 + $0x38] sm:$0xff]
      %v164 = vld [vmem:[%s144 + $0x40] sm:$0xff]
      %v165 = vld [vmem:[%s144 + $0x48] sm:$0xff]
      %v166 = vld [vmem:[%s144 + $0x50] sm:$0xff]
      %v167 = vld [vmem:[%s144 + $0x58] sm:$0xff]
      %v168 = vld [vmem:[%s144 + $0x60] sm:$0xff]
      %v169 = vld [vmem:[%s144 + $0x68] sm:$0xff]
      %v170 = vld [vmem:[%s144 + $0x70] sm:$0xff]
      %v171 = vld [vmem:[%s144 + $0x78] sm:$0xff]
      %v172 = vld [vmem:[%s144 + $0x80] sm:$0xff]
      %v173 = vld [vmem:[%s144 + $0x88] sm:$0xff]
      %v174 = vld [vmem:[%s144 + $0x90] sm:$0xff]
      %v175 = vld [vmem:[%s144 + $0x98] sm:$0xff]
      %v176 = vld [vmem:[%s144 + $0xa0] sm:$0xff]
      %v177 = vld [vmem:[%s144 + $0xa8] sm:$0xff]
      %v178 = vld [vmem:[%s144 + $0xb0] sm:$0xff]
      %v179 = vld [vmem:[%s144 + $0xb8] sm:$0xff]
      %v180 = vld [vmem:[%s144 + $0xc0] sm:$0xff]
      %v181 = vld [vmem:[%s144 + $0xc8] sm:$0xff]
      %v182 = vld [vmem:[%s144 + $0xd0] sm:$0xff]
      %v183 = vld [vmem:[%s144 + $0xd8] sm:$0xff]
      %v184 = vld [vmem:[%s144 + $0xe0] sm:$0xff]
      %v185 = vld [vmem:[%s144 + $0xe8] sm:$0xff]
      %v186 = vld [vmem:[%s144 + $0xf0] sm:$0xff]
      %v187 = vld [vmem:[%s144 + $0xf8] sm:$0xff]
      %v188 = vmul.f32 %v156, 1.442695
      %v189 = vpow.pop %v188
      %v190 = vmul.f32 %v157, 1.442695
      %v191 = vpow.pop %v190
      %v192 = vmul.f32 %v158, 1.442695
      %v193 = vpow.pop %v192
      %v194 = vmul.f32 %v159, 1.442695
      %v195 = vpow.pop %v194
      %v196 = vmul.f32 %v160, 1.442695
      %v197 = vpow.pop %v196
      %v198 = vmul.f32 %v161, 1.442695
      %v199 = vpow.pop %v198
      %v200 = vmul.f32 %v162, 1.442695
      %v201 = vpow.pop %v200
      %v202 = vmul.f32 %v163, 1.442695
      %v203 = vpow.pop %v202
      %v204 = vmul.f32 %v164, 1.442695
      %v205 = vpow.pop %v204
      %v206 = vmul.f32 %v165, 1.442695
      %v207 = vpow.pop %v206
      %v208 = vmul.f32 %v166, 1.442695
      %v209 = vpow.pop %v208
      %v210 = vmul.f32 %v167, 1.442695
      %v211 = vpow.pop %v210
      %v212 = vmul.f32 %v168, 1.442695
      %v213 = vpow.pop %v212
      %v214 = vmul.f32 %v169, 1.442695
      %v215 = vpow.pop %v214
      %v216 = vmul.f32 %v170, 1.442695
      %v217 = vpow.pop %v216
      %v218 = vmul.f32 %v171, 1.442695
      %v219 = vpow.pop %v218
      %v220 = vmul.f32 %v172, 1.442695
      %v221 = vpow.pop %v220
      %v222 = vmul.f32 %v173, 1.442695
      %v223 = vpow.pop %v222
      %v224 = vmul.f32 %v174, 1.442695
      %v225 = vpow.pop %v224
      %v226 = vmul.f32 %v175, 1.442695
      %v227 = vpow.pop %v226
      %v228 = vmul.f32 %v176, 1.442695
      %v229 = vpow.pop %v228
      %v230 = vmul.f32 %v177, 1.442695
      %v231 = vpow.pop %v230
      %v232 = vmul.f32 %v178, 1.442695
      %v233 = vpow.pop %v232
      %v234 = vmul.f32 %v179, 1.442695
      %v235 = vpow.pop %v234
      %v236 = vmul.f32 %v180, 1.442695
      %v237 = vpow.pop %v236
      %v238 = vmul.f32 %v181, 1.442695
      %v239 = vpow.pop %v238
      %v240 = vmul.f32 %v182, 1.442695
      %v241 = vpow.pop %v240
      %v242 = vmul.f32 %v183, 1.442695
      %v243 = vpow.pop %v242
      %v244 = vmul.f32 %v184, 1.442695
      %v245 = vpow.pop %v244
      %v246 = vmul.f32 %v185, 1.442695
      %v247 = vpow.pop %v246
      %v248 = vmul.f32 %v186, 1.442695
      %v249 = vpow.pop %v248
      %v250 = vmul.f32 %v187, 1.442695
      %v251 = vpow.pop %v250
      %284 = vrot.lane.b32.xlu0 %v189, 123
      %v285 = vpop.permute.xlu0 %284
      %286 = vrot.lane.b32.xlu0 %v191, 123
      %v287 = vpop.permute.xlu0 %286
      %288 = vrot.lane.b32.xlu0 %v193, 123
      %v289 = vpop.permute.xlu0 %288
      %290 = vrot.lane.b32.xlu0 %v195, 123
      %v291 = vpop.permute.xlu0 %290
      %292 = vrot.lane.b32.xlu0 %v197, 123
      %v293 = vpop.permute.xlu0 %292
      %294 = vrot.lane.b32.xlu0 %v199, 123
      %v295 = vpop.permute.xlu0 %294
      %296 = vrot.lane.b32.xlu0 %v201, 123
      %v297 = vpop.permute.xlu0 %296
      %298 = vrot.lane.b32.xlu0 %v203, 123
      %v299 = vpop.permute.xlu0 %298
      %300 = vrot.lane.b32.xlu0 %v205, 123
      %v301 = vpop.permute.xlu0 %300
      %302 = vrot.lane.b32.xlu0 %v207, 123
      %v303 = vpop.permute.xlu0 %302
      %304 = vrot.lane.b32.xlu0 %v209, 123
      %v305 = vpop.permute.xlu0 %304
      %306 = vrot.lane.b32.xlu0 %v211, 123
      %v307 = vpop.permute.xlu0 %306
      %308 = vrot.lane.b32.xlu0 %v213, 123
      %v309 = vpop.permute.xlu0 %308
      %310 = vrot.lane.b32.xlu0 %v215, 123
      %v311 = vpop.permute.xlu0 %310
      %312 = vrot.lane.b32.xlu0 %v217, 123
      %v313 = vpop.permute.xlu0 %312
      %314 = vrot.lane.b32.xlu0 %v219, 123
      %v315 = vpop.permute.xlu0 %314
      %316 = vrot.lane.b32.xlu0 %v221, 123
      %v317 = vpop.permute.xlu0 %316
      %318 = vrot.lane.b32.xlu0 %v223, 123
      %v319 = vpop.permute.xlu0 %318
      %320 = vrot.lane.b32.xlu0 %v225, 123
      %v321 = vpop.permute.xlu0 %320
      %322 = vrot.lane.b32.xlu0 %v227, 123
      %v323 = vpop.permute.xlu0 %322
      %324 = vrot.lane.b32.xlu0 %v229, 123
      %v325 = vpop.permute.xlu0 %324
      %326 = vrot.lane.b32.xlu0 %v231, 123
      %v327 = vpop.permute.xlu0 %326
      %328 = vrot.lane.b32.xlu0 %v233, 123
      %v329 = vpop.permute.xlu0 %328
      %330 = vrot.lane.b32.xlu0 %v235, 123
      %v331 = vpop.permute.xlu0 %330
      %332 = vrot.lane.b32.xlu0 %v237, 123
      %v333 = vpop.permute.xlu0 %332
      %334 = vrot.lane.b32.xlu0 %v239, 123
      %v335 = vpop.permute.xlu0 %334
      %336 = vrot.lane.b32.xlu0 %v241, 123
      %v337 = vpop.permute.xlu0 %336
      %338 = vrot.lane.b32.xlu0 %v243, 123
      %v339 = vpop.permute.xlu0 %338
      %340 = vrot.lane.b32.xlu0 %v245, 123
      %v341 = vpop.permute.xlu0 %340
      %342 = vrot.lane.b32.xlu0 %v247, 123
      %v343 = vpop.permute.xlu0 %342
      %344 = vrot.lane.b32.xlu0 %v249, 123
      %v345 = vpop.permute.xlu0 %344
      %346 = vrot.lane.b32.xlu0 %v251, 123
      %v347 = vpop.permute.xlu0 %346
      %v380 = vadd.f32 %v189, %v285
      %v381 = vadd.f32 %v191, %v287
      %v382 = vadd.f32 %v193, %v289
      %v383 = vadd.f32 %v195, %v291
      %v384 = vadd.f32 %v197, %v293
      %v385 = vadd.f32 %v199, %v295
      %v386 = vadd.f32 %v201, %v297
      %v387 = vadd.f32 %v203, %v299
      %v388 = vadd.f32 %v205, %v301
      %v389 = vadd.f32 %v207, %v303
      %v390 = vadd.f32 %v209, %v305
      %v391 = vadd.f32 %v211, %v307
      %v392 = vadd.f32 %v213, %v309
      %v393 = vadd.f32 %v215, %v311
      %v394 = vadd.f32 %v217, %v313
      %v395 = vadd.f32 %v219, %v315
      %v396 = vadd.f32 %v221, %v317
      %v397 = vadd.f32 %v223, %v319
      %v398 = vadd.f32 %v225, %v321
      %v399 = vadd.f32 %v227, %v323
      %v400 = vadd.f32 %v229, %v325
      %v401 = vadd.f32 %v231, %v327
      %v402 = vadd.f32 %v233, %v329
      %v403 = vadd.f32 %v235, %v331
      %v404 = vadd.f32 %v237, %v333
      %v405 = vadd.f32 %v239, %v335
      %v406 = vadd.f32 %v241, %v337
      %v407 = vadd.f32 %v243, %v339
      %v408 = vadd.f32 %v245, %v341
      %v409 = vadd.f32 %v247, %v343
      %v410 = vadd.f32 %v249, %v345
      %v411 = vadd.f32 %v251, %v347
      %412 = vrot.lane.b32.xlu0 %v189, 118
      %v413 = vpop.permute.xlu0 %412
      %414 = vrot.lane.b32.xlu0 %v191, 118
      %v415 = vpop.permute.xlu0 %414
      %416 = vrot.lane.b32.xlu0 %v193, 118
      %v417 = vpop.permute.xlu0 %416
      %418 = vrot.lane.b32.xlu0 %v195, 118
      %v419 = vpop.permute.xlu0 %418
      %420 = vrot.lane.b32.xlu0 %v197, 118
      %v421 = vpop.permute.xlu0 %420
      %422 = vrot.lane.b32.xlu0 %v199, 118
      %v423 = vpop.permute.xlu0 %422
      %424 = vrot.lane.b32.xlu0 %v201, 118
      %v425 = vpop.permute.xlu0 %424
      %426 = vrot.lane.b32.xlu0 %v203, 118
      %v427 = vpop.permute.xlu0 %426
      %428 = vrot.lane.b32.xlu0 %v205, 118
      %v429 = vpop.permute.xlu0 %428
      %430 = vrot.lane.b32.xlu0 %v207, 118
      %v431 = vpop.permute.xlu0 %430
      %432 = vrot.lane.b32.xlu0 %v209, 118
      %v433 = vpop.permute.xlu0 %432
      %434 = vrot.lane.b32.xlu0 %v211, 118
      %v435 = vpop.permute.xlu0 %434
      %436 = vrot.lane.b32.xlu0 %v213, 118
      %v437 = vpop.permute.xlu0 %436
      %438 = vrot.lane.b32.xlu0 %v215, 118
      %v439 = vpop.permute.xlu0 %438
      %440 = vrot.lane.b32.xlu0 %v217, 118
      %v441 = vpop.permute.xlu0 %440
      %442 = vrot.lane.b32.xlu0 %v219, 118
      %v443 = vpop.permute.xlu0 %442
      %444 = vrot.lane.b32.xlu0 %v221, 118
      %v445 = vpop.permute.xlu0 %444
      %446 = vrot.lane.b32.xlu0 %v223, 118
      %v447 = vpop.permute.xlu0 %446
      %448 = vrot.lane.b32.xlu0 %v225, 118
      %v449 = vpop.permute.xlu0 %448
      %450 = vrot.lane.b32.xlu0 %v227, 118
      %v451 = vpop.permute.xlu0 %450
      %452 = vrot.lane.b32.xlu0 %v229, 118
      %v453 = vpop.permute.xlu0 %452
      %454 = vrot.lane.b32.xlu0 %v231, 118
      %v455 = vpop.permute.xlu0 %454
      %456 = vrot.lane.b32.xlu0 %v233, 118
      %v457 = vpop.permute.xlu0 %456
      %458 = vrot.lane.b32.xlu0 %v235, 118
      %v459 = vpop.permute.xlu0 %458
      %460 = vrot.lane.b32.xlu0 %v237, 118
      %v461 = vpop.permute.xlu0 %460
      %462 = vrot.lane.b32.xlu0 %v239, 118
      %v463 = vpop.permute.xlu0 %462
      %464 = vrot.lane.b32.xlu0 %v241, 118
      %v465 = vpop.permute.xlu0 %464
      %466 = vrot.lane.b32.xlu0 %v243, 118
      %v467 = vpop.permute.xlu0 %466
      %468 = vrot.lane.b32.xlu0 %v245, 118
      %v469 = vpop.permute.xlu0 %468
      %470 = vrot.lane.b32.xlu0 %v247, 118
      %v471 = vpop.permute.xlu0 %470
      %472 = vrot.lane.b32.xlu0 %v249, 118
      %v473 = vpop.permute.xlu0 %472
      %474 = vrot.lane.b32.xlu0 %v251, 118
      %v475 = vpop.permute.xlu0 %474
      %v508 = vadd.f32 %v380, %v413
      %v509 = vadd.f32 %v381, %v415
      %v510 = vadd.f32 %v382, %v417
      %v511 = vadd.f32 %v383, %v419
      %v512 = vadd.f32 %v384, %v421
      %v513 = vadd.f32 %v385, %v423
      %v514 = vadd.f32 %v386, %v425
      %v515 = vadd.f32 %v387, %v427
      %v516 = vadd.f32 %v388, %v429
      %v517 = vadd.f32 %v389, %v431
      %v518 = vadd.f32 %v390, %v433
      %v519 = vadd.f32 %v391, %v435
      %v520 = vadd.f32 %v392, %v437
      %v521 = vadd.f32 %v393, %v439
      %v522 = vadd.f32 %v394, %v441
      %v523 = vadd.f32 %v395, %v443
      %v524 = vadd.f32 %v396, %v445
      %v525 = vadd.f32 %v397, %v447
      %v526 = vadd.f32 %v398, %v449
      %v527 = vadd.f32 %v399, %v451
      %v528 = vadd.f32 %v400, %v453
      %v529 = vadd.f32 %v401, %v455
      %v530 = vadd.f32 %v402, %v457
      %v531 = vadd.f32 %v403, %v459
      %v532 = vadd.f32 %v404, %v461
      %v533 = vadd.f32 %v405, %v463
      %v534 = vadd.f32 %v406, %v465
      %v535 = vadd.f32 %v407, %v467
      %v536 = vadd.f32 %v408, %v469
      %v537 = vadd.f32 %v409, %v471
      %v538 = vadd.f32 %v410, %v473
      %v539 = vadd.f32 %v411, %v475
      %540 = vrot.lane.b32.xlu0 %v189, 113
      %v541 = vpop.permute.xlu0 %540
      %542 = vrot.lane.b32.xlu0 %v191, 113
      %v543 = vpop.permute.xlu0 %542
      %544 = vrot.lane.b32.xlu0 %v193, 113
      %v545 = vpop.permute.xlu0 %544
      %546 = vrot.lane.b32.xlu0 %v195, 113
      %v547 = vpop.permute.xlu0 %546
      %548 = vrot.lane.b32.xlu0 %v197, 113
      %v549 = vpop.permute.xlu0 %548
      %550 = vrot.lane.b32.xlu0 %v199, 113
      %v551 = vpop.permute.xlu0 %550
      %552 = vrot.lane.b32.xlu0 %v201, 113
      %v553 = vpop.permute.xlu0 %552
      %554 = vrot.lane.b32.xlu0 %v203, 113
      %v555 = vpop.permute.xlu0 %554
      %556 = vrot.lane.b32.xlu0 %v205, 113
      %v557 = vpop.permute.xlu0 %556
      %558 = vrot.lane.b32.xlu0 %v207, 113
      %v559 = vpop.permute.xlu0 %558
      %560 = vrot.lane.b32.xlu0 %v209, 113
      %v561 = vpop.permute.xlu0 %560
      %562 = vrot.lane.b32.xlu0 %v211, 113
      %v563 = vpop.permute.xlu0 %562
      %564 = vrot.lane.b32.xlu0 %v213, 113
      %v565 = vpop.permute.xlu0 %564
      %566 = vrot.lane.b32.xlu0 %v215, 113
      %v567 = vpop.permute.xlu0 %566
      %568 = vrot.lane.b32.xlu0 %v217, 113
      %v569 = vpop.permute.xlu0 %568
      %570 = vrot.lane.b32.xlu0 %v219, 113
      %v571 = vpop.permute.xlu0 %570
      %572 = vrot.lane.b32.xlu0 %v221, 113
      %v573 = vpop.permute.xlu0 %572
      %574 = vrot.lane.b32.xlu0 %v223, 113
      %v575 = vpop.permute.xlu0 %574
      %576 = vrot.lane.b32.xlu0 %v225, 113
      %v577 = vpop.permute.xlu0 %576
      %578 = vrot.lane.b32.xlu0 %v227, 113
      %v579 = vpop.permute.xlu0 %578
      %580 = vrot.lane.b32.xlu0 %v229, 113
      %v581 = vpop.permute.xlu0 %580
      %582 = vrot.lane.b32.xlu0 %v231, 113
      %v583 = vpop.permute.xlu0 %582
      %584 = vrot.lane.b32.xlu0 %v233, 113
      %v585 = vpop.permute.xlu0 %584
      %586 = vrot.lane.b32.xlu0 %v235, 113
      %v587 = vpop.permute.xlu0 %586
      %588 = vrot.lane.b32.xlu0 %v237, 113
      %v589 = vpop.permute.xlu0 %588
      %590 = vrot.lane.b32.xlu0 %v239, 113
      %v591 = vpop.permute.xlu0 %590
      %592 = vrot.lane.b32.xlu0 %v241, 113
      %v593 = vpop.permute.xlu0 %592
      %594 = vrot.lane.b32.xlu0 %v243, 113
      %v595 = vpop.permute.xlu0 %594
      %596 = vrot.lane.b32.xlu0 %v245, 113
      %v597 = vpop.permute.xlu0 %596
      %598 = vrot.lane.b32.xlu0 %v247, 113
      %v599 = vpop.permute.xlu0 %598
      %600 = vrot.lane.b32.xlu0 %v249, 113
      %v601 = vpop.permute.xlu0 %600
      %602 = vrot.lane.b32.xlu0 %v251, 113
      %v603 = vpop.permute.xlu0 %602
      %v636 = vadd.f32 %v508, %v541
      %v637 = vadd.f32 %v509, %v543
      %v638 = vadd.f32 %v510, %v545
      %v639 = vadd.f32 %v511, %v547
      %v640 = vadd.f32 %v512, %v549
      %v641 = vadd.f32 %v513, %v551
      %v642 = vadd.f32 %v514, %v553
      %v643 = vadd.f32 %v515, %v555
      %v644 = vadd.f32 %v516, %v557
      %v645 = vadd.f32 %v517, %v559
      %v646 = vadd.f32 %v518, %v561
      %v647 = vadd.f32 %v519, %v563
      %v648 = vadd.f32 %v520, %v565
      %v649 = vadd.f32 %v521, %v567
      %v650 = vadd.f32 %v522, %v569
      %v651 = vadd.f32 %v523, %v571
      %v652 = vadd.f32 %v524, %v573
      %v653 = vadd.f32 %v525, %v575
      %v654 = vadd.f32 %v526, %v577
      %v655 = vadd.f32 %v527, %v579
      %v656 = vadd.f32 %v528, %v581
      %v657 = vadd.f32 %v529, %v583
      %v658 = vadd.f32 %v530, %v585
      %v659 = vadd.f32 %v531, %v587
      %v660 = vadd.f32 %v532, %v589
      %v661 = vadd.f32 %v533, %v591
      %v662 = vadd.f32 %v534, %v593
      %v663 = vadd.f32 %v535, %v595
      %v664 = vadd.f32 %v536, %v597
      %v665 = vadd.f32 %v537, %v599
      %v666 = vadd.f32 %v538, %v601
      %v667 = vadd.f32 %v539, %v603
      %668 = vrot.lane.b32.xlu0 %v189, 108
      %v669 = vpop.permute.xlu0 %668
      %670 = vrot.lane.b32.xlu0 %v191, 108
      %v671 = vpop.permute.xlu0 %670
      %672 = vrot.lane.b32.xlu0 %v193, 108
      %v673 = vpop.permute.xlu0 %672
      %674 = vrot.lane.b32.xlu0 %v195, 108
      %v675 = vpop.permute.xlu0 %674
      %676 = vrot.lane.b32.xlu0 %v197, 108
      %v677 = vpop.permute.xlu0 %676
      %678 = vrot.lane.b32.xlu0 %v199, 108
      %v679 = vpop.permute.xlu0 %678
      %680 = vrot.lane.b32.xlu0 %v201, 108
      %v681 = vpop.permute.xlu0 %680
      %682 = vrot.lane.b32.xlu0 %v203, 108
      %v683 = vpop.permute.xlu0 %682
      %684 = vrot.lane.b32.xlu0 %v205, 108
      %v685 = vpop.permute.xlu0 %684
      %686 = vrot.lane.b32.xlu0 %v207, 108
      %v687 = vpop.permute.xlu0 %686
      %688 = vrot.lane.b32.xlu0 %v209, 108
      %v689 = vpop.permute.xlu0 %688
      %690 = vrot.lane.b32.xlu0 %v211, 108
      %v691 = vpop.permute.xlu0 %690
      %692 = vrot.lane.b32.xlu0 %v213, 108
      %v693 = vpop.permute.xlu0 %692
      %694 = vrot.lane.b32.xlu0 %v215, 108
      %v695 = vpop.permute.xlu0 %694
      %696 = vrot.lane.b32.xlu0 %v217, 108
      %v697 = vpop.permute.xlu0 %696
      %698 = vrot.lane.b32.xlu0 %v219, 108
      %v699 = vpop.permute.xlu0 %698
      %700 = vrot.lane.b32.xlu0 %v221, 108
      %v701 = vpop.permute.xlu0 %700
      %702 = vrot.lane.b32.xlu0 %v223, 108
      %v703 = vpop.permute.xlu0 %702
      %704 = vrot.lane.b32.xlu0 %v225, 108
      %v705 = vpop.permute.xlu0 %704
      %706 = vrot.lane.b32.xlu0 %v227, 108
      %v707 = vpop.permute.xlu0 %706
      %708 = vrot.lane.b32.xlu0 %v229, 108
      %v709 = vpop.permute.xlu0 %708
      %710 = vrot.lane.b32.xlu0 %v231, 108
      %v711 = vpop.permute.xlu0 %710
      %712 = vrot.lane.b32.xlu0 %v233, 108
      %v713 = vpop.permute.xlu0 %712
      %714 = vrot.lane.b32.xlu0 %v235, 108
      %v715 = vpop.permute.xlu0 %714
      %716 = vrot.lane.b32.xlu0 %v237, 108
      %v717 = vpop.permute.xlu0 %716
      %718 = vrot.lane.b32.xlu0 %v239, 108
      %v719 = vpop.permute.xlu0 %718
      %720 = vrot.lane.b32.xlu0 %v241, 108
      %v721 = vpop.permute.xlu0 %720
      %722 = vrot.lane.b32.xlu0 %v243, 108
      %v723 = vpop.permute.xlu0 %722
      %724 = vrot.lane.b32.xlu0 %v245, 108
      %v725 = vpop.permute.xlu0 %724
      %726 = vrot.lane.b32.xlu0 %v247, 108
      %v727 = vpop.permute.xlu0 %726
      %728 = vrot.lane.b32.xlu0 %v249, 108
      %v729 = vpop.permute.xlu0 %728
      %730 = vrot.lane.b32.xlu0 %v251, 108
      %v731 = vpop.permute.xlu0 %730
      %v764 = vadd.f32 %v636, %v669
      %v765 = vadd.f32 %v637, %v671
      %v766 = vadd.f32 %v638, %v673
      %v767 = vadd.f32 %v639, %v675
      %v768 = vadd.f32 %v640, %v677
      %v769 = vadd.f32 %v641, %v679
      %v770 = vadd.f32 %v642, %v681
      %v771 = vadd.f32 %v643, %v683
      %v772 = vadd.f32 %v644, %v685
      %v773 = vadd.f32 %v645, %v687
      %v774 = vadd.f32 %v646, %v689
      %v775 = vadd.f32 %v647, %v691
      %v776 = vadd.f32 %v648, %v693
      %v777 = vadd.f32 %v649, %v695
      %v778 = vadd.f32 %v650, %v697
      %v779 = vadd.f32 %v651, %v699
      %v780 = vadd.f32 %v652, %v701
      %v781 = vadd.f32 %v653, %v703
      %v782 = vadd.f32 %v654, %v705
      %v783 = vadd.f32 %v655, %v707
      %v784 = vadd.f32 %v656, %v709
      %v785 = vadd.f32 %v657, %v711
      %v786 = vadd.f32 %v658, %v713
      %v787 = vadd.f32 %v659, %v715
      %v788 = vadd.f32 %v660, %v717
      %v789 = vadd.f32 %v661, %v719
      %v790 = vadd.f32 %v662, %v721
      %v791 = vadd.f32 %v663, %v723
      %v792 = vadd.f32 %v664, %v725
      %v793 = vadd.f32 %v665, %v727
      %v794 = vadd.f32 %v666, %v729
      %v795 = vadd.f32 %v667, %v731
      %vm796 = vcmask 39936
      %v797 = vsel %vm796, %v189, 0.0
      %798 = vadd.xlane.f32.xlu0 %v797
      %v799 = vpop.xlane.xlu0 %798
      %v800 = vsel %vm796, %v191, 0.0
      %801 = vadd.xlane.f32.xlu0 %v800
      %v802 = vpop.xlane.xlu0 %801
      %v803 = vsel %vm796, %v193, 0.0
      %804 = vadd.xlane.f32.xlu0 %v803
      %v805 = vpop.xlane.xlu0 %804
      %v806 = vsel %vm796, %v195, 0.0
      %807 = vadd.xlane.f32.xlu0 %v806
      %v808 = vpop.xlane.xlu0 %807
      %v809 = vsel %vm796, %v197, 0.0
      %810 = vadd.xlane.f32.xlu0 %v809
      %v811 = vpop.xlane.xlu0 %810
      %v812 = vsel %vm796, %v199, 0.0
      %813 = vadd.xlane.f32.xlu0 %v812
      %v814 = vpop.xlane.xlu0 %813
      %v815 = vsel %vm796, %v201, 0.0
      %816 = vadd.xlane.f32.xlu0 %v815
      %v817 = vpop.xlane.xlu0 %816
      %v818 = vsel %vm796, %v203, 0.0
      %819 = vadd.xlane.f32.xlu0 %v818
      %v820 = vpop.xlane.xlu0 %819
      %v821 = vsel %vm796, %v205, 0.0
      %822 = vadd.xlane.f32.xlu0 %v821
      %v823 = vpop.xlane.xlu0 %822
      %v824 = vsel %vm796, %v207, 0.0
      %825 = vadd.xlane.f32.xlu0 %v824
      %v826 = vpop.xlane.xlu0 %825
      %v827 = vsel %vm796, %v209, 0.0
      %828 = vadd.xlane.f32.xlu0 %v827
      %v829 = vpop.xlane.xlu0 %828
      %v830 = vsel %vm796, %v211, 0.0
      %831 = vadd.xlane.f32.xlu0 %v830
      %v832 = vpop.xlane.xlu0 %831
      %v833 = vsel %vm796, %v213, 0.0
      %834 = vadd.xlane.f32.xlu0 %v833
      %v835 = vpop.xlane.xlu0 %834
      %v836 = vsel %vm796, %v215, 0.0
      %837 = vadd.xlane.f32.xlu0 %v836
      %v838 = vpop.xlane.xlu0 %837
      %v839 = vsel %vm796, %v217, 0.0
      %840 = vadd.xlane.f32.xlu0 %v839
      %v841 = vpop.xlane.xlu0 %840
      %v842 = vsel %vm796, %v219, 0.0
      %843 = vadd.xlane.f32.xlu0 %v842
      %v844 = vpop.xlane.xlu0 %843
      %v845 = vsel %vm796, %v221, 0.0
      %846 = vadd.xlane.f32.xlu0 %v845
      %v847 = vpop.xlane.xlu0 %846
      %v848 = vsel %vm796, %v223, 0.0
      %849 = vadd.xlane.f32.xlu0 %v848
      %v850 = vpop.xlane.xlu0 %849
      %v851 = vsel %vm796, %v225, 0.0
      %852 = vadd.xlane.f32.xlu0 %v851
      %v853 = vpop.xlane.xlu0 %852
      %v854 = vsel %vm796, %v227, 0.0
      %855 = vadd.xlane.f32.xlu0 %v854
      %v856 = vpop.xlane.xlu0 %855
      %v857 = vsel %vm796, %v229, 0.0
      %858 = vadd.xlane.f32.xlu0 %v857
      %v859 = vpop.xlane.xlu0 %858
      %v860 = vsel %vm796, %v231, 0.0
      %861 = vadd.xlane.f32.xlu0 %v860
      %v862 = vpop.xlane.xlu0 %861
      %v863 = vsel %vm796, %v233, 0.0
      %864 = vadd.xlane.f32.xlu0 %v863
      %v865 = vpop.xlane.xlu0 %864
      %v866 = vsel %vm796, %v235, 0.0
      %867 = vadd.xlane.f32.xlu0 %v866
      %v868 = vpop.xlane.xlu0 %867
      %v869 = vsel %vm796, %v237, 0.0
      %870 = vadd.xlane.f32.xlu0 %v869
      %v871 = vpop.xlane.xlu0 %870
      %v872 = vsel %vm796, %v239, 0.0
      %873 = vadd.xlane.f32.xlu0 %v872
      %v874 = vpop.xlane.xlu0 %873
      %v875 = vsel %vm796, %v241, 0.0
      %876 = vadd.xlane.f32.xlu0 %v875
      %v877 = vpop.xlane.xlu0 %876
      %v878 = vsel %vm796, %v243, 0.0
      %879 = vadd.xlane.f32.xlu0 %v878
      %v880 = vpop.xlane.xlu0 %879
      %v881 = vsel %vm796, %v245, 0.0
      %882 = vadd.xlane.f32.xlu0 %v881
      %v883 = vpop.xlane.xlu0 %882
      %v884 = vsel %vm796, %v247, 0.0
      %885 = vadd.xlane.f32.xlu0 %v884
      %v886 = vpop.xlane.xlu0 %885
      %v887 = vsel %vm796, %v249, 0.0
      %888 = vadd.xlane.f32.xlu0 %v887
      %v889 = vpop.xlane.xlu0 %888
      %v890 = vsel %vm796, %v251, 0.0
      %891 = vadd.xlane.f32.xlu0 %v890
      %v892 = vpop.xlane.xlu0 %891
      %v893 = vsel %vm796, %v285, 0.0
      %894 = vadd.xlane.f32.xlu0 %v893
      %v895 = vpop.xlane.xlu0 %894
      %v896 = vsel %vm796, %v287, 0.0
      %897 = vadd.xlane.f32.xlu0 %v896
      %v898 = vpop.xlane.xlu0 %897
      %v899 = vsel %vm796, %v289, 0.0
      %900 = vadd.xlane.f32.xlu0 %v899
      %v901 = vpop.xlane.xlu0 %900
      %v902 = vsel %vm796, %v291, 0.0
      %903 = vadd.xlane.f32.xlu0 %v902
      %v904 = vpop.xlane.xlu0 %903
      %v905 = vsel %vm796, %v293, 0.0
      %906 = vadd.xlane.f32.xlu0 %v905
      %v907 = vpop.xlane.xlu0 %906
      %v908 = vsel %vm796, %v295, 0.0
      %909 = vadd.xlane.f32.xlu0 %v908
      %v910 = vpop.xlane.xlu0 %909
      %v911 = vsel %vm796, %v297, 0.0
      %912 = vadd.xlane.f32.xlu0 %v911
      %v913 = vpop.xlane.xlu0 %912
      %v914 = vsel %vm796, %v299, 0.0
      %915 = vadd.xlane.f32.xlu0 %v914
      %v916 = vpop.xlane.xlu0 %915
      %v917 = vsel %vm796, %v301, 0.0
      %918 = vadd.xlane.f32.xlu0 %v917
      %v919 = vpop.xlane.xlu0 %918
      %v920 = vsel %vm796, %v303, 0.0
      %921 = vadd.xlane.f32.xlu0 %v920
      %v922 = vpop.xlane.xlu0 %921
      %v923 = vsel %vm796, %v305, 0.0
      %924 = vadd.xlane.f32.xlu0 %v923
      %v925 = vpop.xlane.xlu0 %924
      %v926 = vsel %vm796, %v307, 0.0
      %927 = vadd.xlane.f32.xlu0 %v926
      %v928 = vpop.xlane.xlu0 %927
      %v929 = vsel %vm796, %v309, 0.0
      %930 = vadd.xlane.f32.xlu0 %v929
      %v931 = vpop.xlane.xlu0 %930
      %v932 = vsel %vm796, %v311, 0.0
      %933 = vadd.xlane.f32.xlu0 %v932
      %v934 = vpop.xlane.xlu0 %933
      %v935 = vsel %vm796, %v313, 0.0
      %936 = vadd.xlane.f32.xlu0 %v935
      %v937 = vpop.xlane.xlu0 %936
      %v938 = vsel %vm796, %v315, 0.0
      %939 = vadd.xlane.f32.xlu0 %v938
      %v940 = vpop.xlane.xlu0 %939
      %v941 = vsel %vm796, %v317, 0.0
      %942 = vadd.xlane.f32.xlu0 %v941
      %v943 = vpop.xlane.xlu0 %942
      %v944 = vsel %vm796, %v319, 0.0
      %945 = vadd.xlane.f32.xlu0 %v944
      %v946 = vpop.xlane.xlu0 %945
      %v947 = vsel %vm796, %v321, 0.0
      %948 = vadd.xlane.f32.xlu0 %v947
      %v949 = vpop.xlane.xlu0 %948
      %v950 = vsel %vm796, %v323, 0.0
      %951 = vadd.xlane.f32.xlu0 %v950
      %v952 = vpop.xlane.xlu0 %951
      %v953 = vsel %vm796, %v325, 0.0
      %954 = vadd.xlane.f32.xlu0 %v953
      %v955 = vpop.xlane.xlu0 %954
      %v956 = vsel %vm796, %v327, 0.0
      %957 = vadd.xlane.f32.xlu0 %v956
      %v958 = vpop.xlane.xlu0 %957
      %v959 = vsel %vm796, %v329, 0.0
      %960 = vadd.xlane.f32.xlu0 %v959
      %v961 = vpop.xlane.xlu0 %960
      %v962 = vsel %vm796, %v331, 0.0
      %963 = vadd.xlane.f32.xlu0 %v962
      %v964 = vpop.xlane.xlu0 %963
      %v965 = vsel %vm796, %v333, 0.0
      %966 = vadd.xlane.f32.xlu0 %v965
      %v967 = vpop.xlane.xlu0 %966
      %v968 = vsel %vm796, %v335, 0.0
      %969 = vadd.xlane.f32.xlu0 %v968
      %v970 = vpop.xlane.xlu0 %969
      %v971 = vsel %vm796, %v337, 0.0
      %972 = vadd.xlane.f32.xlu0 %v971
      %v973 = vpop.xlane.xlu0 %972
      %v974 = vsel %vm796, %v339, 0.0
      %975 = vadd.xlane.f32.xlu0 %v974
      %v976 = vpop.xlane.xlu0 %975
      %v977 = vsel %vm796, %v341, 0.0
      %978 = vadd.xlane.f32.xlu0 %v977
      %v979 = vpop.xlane.xlu0 %978
      %v980 = vsel %vm796, %v343, 0.0
      %981 = vadd.xlane.f32.xlu0 %v980
      %v982 = vpop.xlane.xlu0 %981
      %v983 = vsel %vm796, %v345, 0.0
      %984 = vadd.xlane.f32.xlu0 %v983
      %v985 = vpop.xlane.xlu0 %984
      %v986 = vsel %vm796, %v347, 0.0
      %987 = vadd.xlane.f32.xlu0 %v986
      %v988 = vpop.xlane.xlu0 %987
      %v989 = vsel %vm796, %v413, 0.0
      %990 = vadd.xlane.f32.xlu0 %v989
      %v991 = vpop.xlane.xlu0 %990
      %v992 = vsel %vm796, %v415, 0.0
      %993 = vadd.xlane.f32.xlu0 %v992
      %v994 = vpop.xlane.xlu0 %993
      %v995 = vsel %vm796, %v417, 0.0
      %996 = vadd.xlane.f32.xlu0 %v995
      %v997 = vpop.xlane.xlu0 %996
      %v998 = vsel %vm796, %v419, 0.0
      %999 = vadd.xlane.f32.xlu0 %v998
      %v1000 = vpop.xlane.xlu0 %999
      %v1001 = vsel %vm796, %v421, 0.0
      %1002 = vadd.xlane.f32.xlu0 %v1001
      %v1003 = vpop.xlane.xlu0 %1002
      %v1004 = vsel %vm796, %v423, 0.0
      %1005 = vadd.xlane.f32.xlu0 %v1004
      %v1006 = vpop.xlane.xlu0 %1005
      %v1007 = vsel %vm796, %v425, 0.0
      %1008 = vadd.xlane.f32.xlu0 %v1007
      %v1009 = vpop.xlane.xlu0 %1008
      %v1010 = vsel %vm796, %v427, 0.0
      %1011 = vadd.xlane.f32.xlu0 %v1010
      %v1012 = vpop.xlane.xlu0 %1011
      %v1013 = vsel %vm796, %v429, 0.0
      %1014 = vadd.xlane.f32.xlu0 %v1013
      %v1015 = vpop.xlane.xlu0 %1014
      %v1016 = vsel %vm796, %v431, 0.0
      %1017 = vadd.xlane.f32.xlu0 %v1016
      %v1018 = vpop.xlane.xlu0 %1017
      %v1019 = vsel %vm796, %v433, 0.0
      %1020 = vadd.xlane.f32.xlu0 %v1019
      %v1021 = vpop.xlane.xlu0 %1020
      %v1022 = vsel %vm796, %v435, 0.0
      %1023 = vadd.xlane.f32.xlu0 %v1022
      %v1024 = vpop.xlane.xlu0 %1023
      %v1025 = vsel %vm796, %v437, 0.0
      %1026 = vadd.xlane.f32.xlu0 %v1025
      %v1027 = vpop.xlane.xlu0 %1026
      %v1028 = vsel %vm796, %v439, 0.0
      %1029 = vadd.xlane.f32.xlu0 %v1028
      %v1030 = vpop.xlane.xlu0 %1029
      %v1031 = vsel %vm796, %v441, 0.0
      %1032 = vadd.xlane.f32.xlu0 %v1031
      %v1033 = vpop.xlane.xlu0 %1032
      %v1034 = vsel %vm796, %v443, 0.0
      %1035 = vadd.xlane.f32.xlu0 %v1034
      %v1036 = vpop.xlane.xlu0 %1035
      %v1037 = vsel %vm796, %v445, 0.0
      %1038 = vadd.xlane.f32.xlu0 %v1037
      %v1039 = vpop.xlane.xlu0 %1038
      %v1040 = vsel %vm796, %v447, 0.0
      %1041 = vadd.xlane.f32.xlu0 %v1040
      %v1042 = vpop.xlane.xlu0 %1041
      %v1043 = vsel %vm796, %v449, 0.0
      %1044 = vadd.xlane.f32.xlu0 %v1043
      %v1045 = vpop.xlane.xlu0 %1044
      %v1046 = vsel %vm796, %v451, 0.0
      %1047 = vadd.xlane.f32.xlu0 %v1046
      %v1048 = vpop.xlane.xlu0 %1047
      %v1049 = vsel %vm796, %v453, 0.0
      %1050 = vadd.xlane.f32.xlu0 %v1049
      %v1051 = vpop.xlane.xlu0 %1050
      %v1052 = vsel %vm796, %v455, 0.0
      %1053 = vadd.xlane.f32.xlu0 %v1052
      %v1054 = vpop.xlane.xlu0 %1053
      %v1055 = vsel %vm796, %v457, 0.0
      %1056 = vadd.xlane.f32.xlu0 %v1055
      %v1057 = vpop.xlane.xlu0 %1056
      %v1058 = vsel %vm796, %v459, 0.0
      %1059 = vadd.xlane.f32.xlu0 %v1058
      %v1060 = vpop.xlane.xlu0 %1059
      %v1061 = vsel %vm796, %v461, 0.0
      %1062 = vadd.xlane.f32.xlu0 %v1061
      %v1063 = vpop.xlane.xlu0 %1062
      %v1064 = vsel %vm796, %v463, 0.0
      %1065 = vadd.xlane.f32.xlu0 %v1064
      %v1066 = vpop.xlane.xlu0 %1065
      %v1067 = vsel %vm796, %v465, 0.0
      %1068 = vadd.xlane.f32.xlu0 %v1067
      %v1069 = vpop.xlane.xlu0 %1068
      %v1070 = vsel %vm796, %v467, 0.0
      %1071 = vadd.xlane.f32.xlu0 %v1070
      %v1072 = vpop.xlane.xlu0 %1071
      %v1073 = vsel %vm796, %v469, 0.0
      %1074 = vadd.xlane.f32.xlu0 %v1073
      %v1075 = vpop.xlane.xlu0 %1074
      %v1076 = vsel %vm796, %v471, 0.0
      %1077 = vadd.xlane.f32.xlu0 %v1076
      %v1078 = vpop.xlane.xlu0 %1077
      %v1079 = vsel %vm796, %v473, 0.0
      %1080 = vadd.xlane.f32.xlu0 %v1079
      %v1081 = vpop.xlane.xlu0 %1080
      %v1082 = vsel %vm796, %v475, 0.0
      %1083 = vadd.xlane.f32.xlu0 %v1082
      %v1084 = vpop.xlane.xlu0 %1083
      %v1085 = vsel %vm796, %v541, 0.0
      %1086 = vadd.xlane.f32.xlu0 %v1085
      %v1087 = vpop.xlane.xlu0 %1086
      %v1088 = vsel %vm796, %v543, 0.0
      %1089 = vadd.xlane.f32.xlu0 %v1088
      %v1090 = vpop.xlane.xlu0 %1089
      %v1091 = vsel %vm796, %v545, 0.0
      %1092 = vadd.xlane.f32.xlu0 %v1091
      %v1093 = vpop.xlane.xlu0 %1092
      %v1094 = vsel %vm796, %v547, 0.0
      %1095 = vadd.xlane.f32.xlu0 %v1094
      %v1096 = vpop.xlane.xlu0 %1095
      %v1097 = vsel %vm796, %v549, 0.0
      %1098 = vadd.xlane.f32.xlu0 %v1097
      %v1099 = vpop.xlane.xlu0 %1098
      %v1100 = vsel %vm796, %v551, 0.0
      %1101 = vadd.xlane.f32.xlu0 %v1100
      %v1102 = vpop.xlane.xlu0 %1101
      %v1103 = vsel %vm796, %v553, 0.0
      %1104 = vadd.xlane.f32.xlu0 %v1103
      %v1105 = vpop.xlane.xlu0 %1104
      %v1106 = vsel %vm796, %v555, 0.0
      %1107 = vadd.xlane.f32.xlu0 %v1106
      %v1108 = vpop.xlane.xlu0 %1107
      %v1109 = vsel %vm796, %v557, 0.0
      %1110 = vadd.xlane.f32.xlu0 %v1109
      %v1111 = vpop.xlane.xlu0 %1110
      %v1112 = vsel %vm796, %v559, 0.0
      %1113 = vadd.xlane.f32.xlu0 %v1112
      %v1114 = vpop.xlane.xlu0 %1113
      %v1115 = vsel %vm796, %v561, 0.0
      %1116 = vadd.xlane.f32.xlu0 %v1115
      %v1117 = vpop.xlane.xlu0 %1116
      %v1118 = vsel %vm796, %v563, 0.0
      %1119 = vadd.xlane.f32.xlu0 %v1118
      %v1120 = vpop.xlane.xlu0 %1119
      %v1121 = vsel %vm796, %v565, 0.0
      %1122 = vadd.xlane.f32.xlu0 %v1121
      %v1123 = vpop.xlane.xlu0 %1122
      %v1124 = vsel %vm796, %v567, 0.0
      %1125 = vadd.xlane.f32.xlu0 %v1124
      %v1126 = vpop.xlane.xlu0 %1125
      %v1127 = vsel %vm796, %v569, 0.0
      %1128 = vadd.xlane.f32.xlu0 %v1127
      %v1129 = vpop.xlane.xlu0 %1128
      %v1130 = vsel %vm796, %v571, 0.0
      %1131 = vadd.xlane.f32.xlu0 %v1130
      %v1132 = vpop.xlane.xlu0 %1131
      %v1133 = vsel %vm796, %v573, 0.0
      %1134 = vadd.xlane.f32.xlu0 %v1133
      %v1135 = vpop.xlane.xlu0 %1134
      %v1136 = vsel %vm796, %v575, 0.0
      %1137 = vadd.xlane.f32.xlu0 %v1136
      %v1138 = vpop.xlane.xlu0 %1137
      %v1139 = vsel %vm796, %v577, 0.0
      %1140 = vadd.xlane.f32.xlu0 %v1139
      %v1141 = vpop.xlane.xlu0 %1140
      %v1142 = vsel %vm796, %v579, 0.0
      %1143 = vadd.xlane.f32.xlu0 %v1142
      %v1144 = vpop.xlane.xlu0 %1143
      %v1145 = vsel %vm796, %v581, 0.0
      %1146 = vadd.xlane.f32.xlu0 %v1145
      %v1147 = vpop.xlane.xlu0 %1146
      %v1148 = vsel %vm796, %v583, 0.0
      %1149 = vadd.xlane.f32.xlu0 %v1148
      %v1150 = vpop.xlane.xlu0 %1149
      %v1151 = vsel %vm796, %v585, 0.0
      %1152 = vadd.xlane.f32.xlu0 %v1151
      %v1153 = vpop.xlane.xlu0 %1152
      %v1154 = vsel %vm796, %v587, 0.0
      %1155 = vadd.xlane.f32.xlu0 %v1154
      %v1156 = vpop.xlane.xlu0 %1155
      %v1157 = vsel %vm796, %v589, 0.0
      %1158 = vadd.xlane.f32.xlu0 %v1157
      %v1159 = vpop.xlane.xlu0 %1158
      %v1160 = vsel %vm796, %v591, 0.0
      %1161 = vadd.xlane.f32.xlu0 %v1160
      %v1162 = vpop.xlane.xlu0 %1161
      %v1163 = vsel %vm796, %v593, 0.0
      %1164 = vadd.xlane.f32.xlu0 %v1163
      %v1165 = vpop.xlane.xlu0 %1164
      %v1166 = vsel %vm796, %v595, 0.0
      %1167 = vadd.xlane.f32.xlu0 %v1166
      %v1168 = vpop.xlane.xlu0 %1167
      %v1169 = vsel %vm796, %v597, 0.0
      %1170 = vadd.xlane.f32.xlu0 %v1169
      %v1171 = vpop.xlane.xlu0 %1170
      %v1172 = vsel %vm796, %v599, 0.0
      %1173 = vadd.xlane.f32.xlu0 %v1172
      %v1174 = vpop.xlane.xlu0 %1173
      %v1175 = vsel %vm796, %v601, 0.0
      %1176 = vadd.xlane.f32.xlu0 %v1175
      %v1177 = vpop.xlane.xlu0 %1176
      %v1178 = vsel %vm796, %v603, 0.0
      %1179 = vadd.xlane.f32.xlu0 %v1178
      %v1180 = vpop.xlane.xlu0 %1179
      %v1181 = vsel %vm796, %v669, 0.0
      %1182 = vadd.xlane.f32.xlu0 %v1181
      %v1183 = vpop.xlane.xlu0 %1182
      %v1184 = vsel %vm796, %v671, 0.0
      %1185 = vadd.xlane.f32.xlu0 %v1184
      %v1186 = vpop.xlane.xlu0 %1185
      %v1187 = vsel %vm796, %v673, 0.0
      %1188 = vadd.xlane.f32.xlu0 %v1187
      %v1189 = vpop.xlane.xlu0 %1188
      %v1190 = vsel %vm796, %v675, 0.0
      %1191 = vadd.xlane.f32.xlu0 %v1190
      %v1192 = vpop.xlane.xlu0 %1191
      %v1193 = vsel %vm796, %v677, 0.0
      %1194 = vadd.xlane.f32.xlu0 %v1193
      %v1195 = vpop.xlane.xlu0 %1194
      %v1196 = vsel %vm796, %v679, 0.0
      %1197 = vadd.xlane.f32.xlu0 %v1196
      %v1198 = vpop.xlane.xlu0 %1197
      %v1199 = vsel %vm796, %v681, 0.0
      %1200 = vadd.xlane.f32.xlu0 %v1199
      %v1201 = vpop.xlane.xlu0 %1200
      %v1202 = vsel %vm796, %v683, 0.0
      %1203 = vadd.xlane.f32.xlu0 %v1202
      %v1204 = vpop.xlane.xlu0 %1203
      %v1205 = vsel %vm796, %v685, 0.0
      %1206 = vadd.xlane.f32.xlu0 %v1205
      %v1207 = vpop.xlane.xlu0 %1206
      %v1208 = vsel %vm796, %v687, 0.0
      %1209 = vadd.xlane.f32.xlu0 %v1208
      %v1210 = vpop.xlane.xlu0 %1209
      %v1211 = vsel %vm796, %v689, 0.0
      %1212 = vadd.xlane.f32.xlu0 %v1211
      %v1213 = vpop.xlane.xlu0 %1212
      %v1214 = vsel %vm796, %v691, 0.0
      %1215 = vadd.xlane.f32.xlu0 %v1214
      %v1216 = vpop.xlane.xlu0 %1215
      %v1217 = vsel %vm796, %v693, 0.0
      %1218 = vadd.xlane.f32.xlu0 %v1217
      %v1219 = vpop.xlane.xlu0 %1218
      %v1220 = vsel %vm796, %v695, 0.0
      %1221 = vadd.xlane.f32.xlu0 %v1220
      %v1222 = vpop.xlane.xlu0 %1221
      %v1223 = vsel %vm796, %v697, 0.0
      %1224 = vadd.xlane.f32.xlu0 %v1223
      %v1225 = vpop.xlane.xlu0 %1224
      %v1226 = vsel %vm796, %v699, 0.0
      %1227 = vadd.xlane.f32.xlu0 %v1226
      %v1228 = vpop.xlane.xlu0 %1227
      %v1229 = vsel %vm796, %v701, 0.0
      %1230 = vadd.xlane.f32.xlu0 %v1229
      %v1231 = vpop.xlane.xlu0 %1230
      %v1232 = vsel %vm796, %v703, 0.0
      %1233 = vadd.xlane.f32.xlu0 %v1232
      %v1234 = vpop.xlane.xlu0 %1233
      %v1235 = vsel %vm796, %v705, 0.0
      %1236 = vadd.xlane.f32.xlu0 %v1235
      %v1237 = vpop.xlane.xlu0 %1236
      %v1238 = vsel %vm796, %v707, 0.0
      %1239 = vadd.xlane.f32.xlu0 %v1238
      %v1240 = vpop.xlane.xlu0 %1239
      %v1241 = vsel %vm796, %v709, 0.0
      %1242 = vadd.xlane.f32.xlu0 %v1241
      %v1243 = vpop.xlane.xlu0 %1242
      %v1244 = vsel %vm796, %v711, 0.0
      %1245 = vadd.xlane.f32.xlu0 %v1244
      %v1246 = vpop.xlane.xlu0 %1245
      %v1247 = vsel %vm796, %v713, 0.0
      %1248 = vadd.xlane.f32.xlu0 %v1247
      %v1249 = vpop.xlane.xlu0 %1248
      %v1250 = vsel %vm796, %v715, 0.0
      %1251 = vadd.xlane.f32.xlu0 %v1250
      %v1252 = vpop.xlane.xlu0 %1251
      %v1253 = vsel %vm796, %v717, 0.0
      %1254 = vadd.xlane.f32.xlu0 %v1253
      %v1255 = vpop.xlane.xlu0 %1254
      %v1256 = vsel %vm796, %v719, 0.0
      %1257 = vadd.xlane.f32.xlu0 %v1256
      %v1258 = vpop.xlane.xlu0 %1257
      %v1259 = vsel %vm796, %v721, 0.0
      %1260 = vadd.xlane.f32.xlu0 %v1259
      %v1261 = vpop.xlane.xlu0 %1260
      %v1262 = vsel %vm796, %v723, 0.0
      %1263 = vadd.xlane.f32.xlu0 %v1262
      %v1264 = vpop.xlane.xlu0 %1263
      %v1265 = vsel %vm796, %v725, 0.0
      %1266 = vadd.xlane.f32.xlu0 %v1265
      %v1267 = vpop.xlane.xlu0 %1266
      %v1268 = vsel %vm796, %v727, 0.0
      %1269 = vadd.xlane.f32.xlu0 %v1268
      %v1270 = vpop.xlane.xlu0 %1269
      %v1271 = vsel %vm796, %v729, 0.0
      %1272 = vadd.xlane.f32.xlu0 %v1271
      %v1273 = vpop.xlane.xlu0 %1272
      %v1274 = vsel %vm796, %v731, 0.0
      %1275 = vadd.xlane.f32.xlu0 %v1274
      %v1276 = vpop.xlane.xlu0 %1275
      %vm1277 = vcmask 7168
      %v1278 = vsel %vm1277, %v799, %v895
      %v1279 = vsel %vm1277, %v802, %v898
      %v1280 = vsel %vm1277, %v805, %v901
      %v1281 = vsel %vm1277, %v808, %v904
      %v1282 = vsel %vm1277, %v811, %v907
      %v1283 = vsel %vm1277, %v814, %v910
      %v1284 = vsel %vm1277, %v817, %v913
      %v1285 = vsel %vm1277, %v820, %v916
      %v1286 = vsel %vm1277, %v823, %v919
      %v1287 = vsel %vm1277, %v826, %v922
      %v1288 = vsel %vm1277, %v829, %v925
      %v1289 = vsel %vm1277, %v832, %v928
      %v1290 = vsel %vm1277, %v835, %v931
      %v1291 = vsel %vm1277, %v838, %v934
      %v1292 = vsel %vm1277, %v841, %v937
      %v1293 = vsel %vm1277, %v844, %v940
      %v1294 = vsel %vm1277, %v847, %v943
      %v1295 = vsel %vm1277, %v850, %v946
      %v1296 = vsel %vm1277, %v853, %v949
      %v1297 = vsel %vm1277, %v856, %v952
      %v1298 = vsel %vm1277, %v859, %v955
      %v1299 = vsel %vm1277, %v862, %v958
      %v1300 = vsel %vm1277, %v865, %v961
      %v1301 = vsel %vm1277, %v868, %v964
      %v1302 = vsel %vm1277, %v871, %v967
      %v1303 = vsel %vm1277, %v874, %v970
      %v1304 = vsel %vm1277, %v877, %v973
      %v1305 = vsel %vm1277, %v880, %v976
      %v1306 = vsel %vm1277, %v883, %v979
      %v1307 = vsel %vm1277, %v886, %v982
      %v1308 = vsel %vm1277, %v889, %v985
      %v1309 = vsel %vm1277, %v892, %v988
      %vm1310 = vcmask 15360
      %v1311 = vsel %vm1310, %v1278, %v991
      %v1312 = vsel %vm1310, %v1279, %v994
      %v1313 = vsel %vm1310, %v1280, %v997
      %v1314 = vsel %vm1310, %v1281, %v1000
      %v1315 = vsel %vm1310, %v1282, %v1003
      %v1316 = vsel %vm1310, %v1283, %v1006
      %v1317 = vsel %vm1310, %v1284, %v1009
      %v1318 = vsel %vm1310, %v1285, %v1012
      %v1319 = vsel %vm1310, %v1286, %v1015
      %v1320 = vsel %vm1310, %v1287, %v1018
      %v1321 = vsel %vm1310, %v1288, %v1021
      %v1322 = vsel %vm1310, %v1289, %v1024
      %v1323 = vsel %vm1310, %v1290, %v1027
      %v1324 = vsel %vm1310, %v1291, %v1030
      %v1325 = vsel %vm1310, %v1292, %v1033
      %v1326 = vsel %vm1310, %v1293, %v1036
      %v1327 = vsel %vm1310, %v1294, %v1039
      %v1328 = vsel %vm1310, %v1295, %v1042
      %v1329 = vsel %vm1310, %v1296, %v1045
      %v1330 = vsel %vm1310, %v1297, %v1048
      %v1331 = vsel %vm1310, %v1298, %v1051
      %v1332 = vsel %vm1310, %v1299, %v1054
      %v1333 = vsel %vm1310, %v1300, %v1057
      %v1334 = vsel %vm1310, %v1301, %v1060
      %v1335 = vsel %vm1310, %v1302, %v1063
      %v1336 = vsel %vm1310, %v1303, %v1066
      %v1337 = vsel %vm1310, %v1304, %v1069
      %v1338 = vsel %vm1310, %v1305, %v1072
      %v1339 = vsel %vm1310, %v1306, %v1075
      %v1340 = vsel %vm1310, %v1307, %v1078
      %v1341 = vsel %vm1310, %v1308, %v1081
      %v1342 = vsel %vm1310, %v1309, %v1084
      %vm1343 = vcmask 23552
      %v1344 = vsel %vm1343, %v1311, %v1087
      %v1345 = vsel %vm1343, %v1312, %v1090
      %v1346 = vsel %vm1343, %v1313, %v1093
      %v1347 = vsel %vm1343, %v1314, %v1096
      %v1348 = vsel %vm1343, %v1315, %v1099
      %v1349 = vsel %vm1343, %v1316, %v1102
      %v1350 = vsel %vm1343, %v1317, %v1105
      %v1351 = vsel %vm1343, %v1318, %v1108
      %v1352 = vsel %vm1343, %v1319, %v1111
      %v1353 = vsel %vm1343, %v1320, %v1114
      %v1354 = vsel %vm1343, %v1321, %v1117
      %v1355 = vsel %vm1343, %v1322, %v1120
      %v1356 = vsel %vm1343, %v1323, %v1123
      %v1357 = vsel %vm1343, %v1324, %v1126
      %v1358 = vsel %vm1343, %v1325, %v1129
      %v1359 = vsel %vm1343, %v1326, %v1132
      %v1360 = vsel %vm1343, %v1327, %v1135
      %v1361 = vsel %vm1343, %v1328, %v1138
      %v1362 = vsel %vm1343, %v1329, %v1141
      %v1363 = vsel %vm1343, %v1330, %v1144
      %v1364 = vsel %vm1343, %v1331, %v1147
      %v1365 = vsel %vm1343, %v1332, %v1150
      %v1366 = vsel %vm1343, %v1333, %v1153
      %v1367 = vsel %vm1343, %v1334, %v1156
      %v1368 = vsel %vm1343, %v1335, %v1159
      %v1369 = vsel %vm1343, %v1336, %v1162
      %v1370 = vsel %vm1343, %v1337, %v1165
      %v1371 = vsel %vm1343, %v1338, %v1168
      %v1372 = vsel %vm1343, %v1339, %v1171
      %v1373 = vsel %vm1343, %v1340, %v1174
      %v1374 = vsel %vm1343, %v1341, %v1177
      %v1375 = vsel %vm1343, %v1342, %v1180
      %vm1376 = vcmask 31744
      %v1377 = vsel %vm1376, %v1344, %v1183
      %v1378 = vsel %vm1376, %v1345, %v1186
      %v1379 = vsel %vm1376, %v1346, %v1189
      %v1380 = vsel %vm1376, %v1347, %v1192
      %v1381 = vsel %vm1376, %v1348, %v1195
      %v1382 = vsel %vm1376, %v1349, %v1198
      %v1383 = vsel %vm1376, %v1350, %v1201
      %v1384 = vsel %vm1376, %v1351, %v1204
      %v1385 = vsel %vm1376, %v1352, %v1207
      %v1386 = vsel %vm1376, %v1353, %v1210
      %v1387 = vsel %vm1376, %v1354, %v1213
      %v1388 = vsel %vm1376, %v1355, %v1216
      %v1389 = vsel %vm1376, %v1356, %v1219
      %v1390 = vsel %vm1376, %v1357, %v1222
      %v1391 = vsel %vm1376, %v1358, %v1225
      %v1392 = vsel %vm1376, %v1359, %v1228
      %v1393 = vsel %vm1376, %v1360, %v1231
      %v1394 = vsel %vm1376, %v1361, %v1234
      %v1395 = vsel %vm1376, %v1362, %v1237
      %v1396 = vsel %vm1376, %v1363, %v1240
      %v1397 = vsel %vm1376, %v1364, %v1243
      %v1398 = vsel %vm1376, %v1365, %v1246
      %v1399 = vsel %vm1376, %v1366, %v1249
      %v1400 = vsel %vm1376, %v1367, %v1252
      %v1401 = vsel %vm1376, %v1368, %v1255
      %v1402 = vsel %vm1376, %v1369, %v1258
      %v1403 = vsel %vm1376, %v1370, %v1261
      %v1404 = vsel %vm1376, %v1371, %v1264
      %v1405 = vsel %vm1376, %v1372, %v1267
      %v1406 = vsel %vm1376, %v1373, %v1270
      %v1407 = vsel %vm1376, %v1374, %v1273
      %v1408 = vsel %vm1376, %v1375, %v1276
      %v1409 = vsel %vm796, %v764, -inf
      %1410 = vmax.xlane.f32.xlu0 %v1409
      %v1411 = vpop.xlane.xlu0 %1410
      %v1412 = vsel %vm796, %v765, -inf
      %1413 = vmax.xlane.f32.xlu0 %v1412
      %v1414 = vpop.xlane.xlu0 %1413
      %v1415 = vsel %vm796, %v766, -inf
      %1416 = vmax.xlane.f32.xlu0 %v1415
      %v1417 = vpop.xlane.xlu0 %1416
      %v1418 = vsel %vm796, %v767, -inf
      %1419 = vmax.xlane.f32.xlu0 %v1418
      %v1420 = vpop.xlane.xlu0 %1419
      %v1421 = vsel %vm796, %v768, -inf
      %1422 = vmax.xlane.f32.xlu0 %v1421
      %v1423 = vpop.xlane.xlu0 %1422
      %v1424 = vsel %vm796, %v769, -inf
      %1425 = vmax.xlane.f32.xlu0 %v1424
      %v1426 = vpop.xlane.xlu0 %1425
      %v1427 = vsel %vm796, %v770, -inf
      %1428 = vmax.xlane.f32.xlu0 %v1427
      %v1429 = vpop.xlane.xlu0 %1428
      %v1430 = vsel %vm796, %v771, -inf
      %1431 = vmax.xlane.f32.xlu0 %v1430
      %v1432 = vpop.xlane.xlu0 %1431
      %v1433 = vsel %vm796, %v772, -inf
      %1434 = vmax.xlane.f32.xlu0 %v1433
      %v1435 = vpop.xlane.xlu0 %1434
      %v1436 = vsel %vm796, %v773, -inf
      %1437 = vmax.xlane.f32.xlu0 %v1436
      %v1438 = vpop.xlane.xlu0 %1437
      %v1439 = vsel %vm796, %v774, -inf
      %1440 = vmax.xlane.f32.xlu0 %v1439
      %v1441 = vpop.xlane.xlu0 %1440
      %v1442 = vsel %vm796, %v775, -inf
      %1443 = vmax.xlane.f32.xlu0 %v1442
      %v1444 = vpop.xlane.xlu0 %1443
      %v1445 = vsel %vm796, %v776, -inf
      %1446 = vmax.xlane.f32.xlu0 %v1445
      %v1447 = vpop.xlane.xlu0 %1446
      %v1448 = vsel %vm796, %v777, -inf
      %1449 = vmax.xlane.f32.xlu0 %v1448
      %v1450 = vpop.xlane.xlu0 %1449
      %v1451 = vsel %vm796, %v778, -inf
      %1452 = vmax.xlane.f32.xlu0 %v1451
      %v1453 = vpop.xlane.xlu0 %1452
      %v1454 = vsel %vm796, %v779, -inf
      %1455 = vmax.xlane.f32.xlu0 %v1454
      %v1456 = vpop.xlane.xlu0 %1455
      %v1457 = vsel %vm796, %v780, -inf
      %1458 = vmax.xlane.f32.xlu0 %v1457
      %v1459 = vpop.xlane.xlu0 %1458
      %v1460 = vsel %vm796, %v781, -inf
      %1461 = vmax.xlane.f32.xlu0 %v1460
      %v1462 = vpop.xlane.xlu0 %1461
      %v1463 = vsel %vm796, %v782, -inf
      %1464 = vmax.xlane.f32.xlu0 %v1463
      %v1465 = vpop.xlane.xlu0 %1464
      %v1466 = vsel %vm796, %v783, -inf
      %1467 = vmax.xlane.f32.xlu0 %v1466
      %v1468 = vpop.xlane.xlu0 %1467
      %v1469 = vsel %vm796, %v784, -inf
      %1470 = vmax.xlane.f32.xlu0 %v1469
      %v1471 = vpop.xlane.xlu0 %1470
      %v1472 = vsel %vm796, %v785, -inf
      %1473 = vmax.xlane.f32.xlu0 %v1472
      %v1474 = vpop.xlane.xlu0 %1473
      %v1475 = vsel %vm796, %v786, -inf
      %1476 = vmax.xlane.f32.xlu0 %v1475
      %v1477 = vpop.xlane.xlu0 %1476
      %v1478 = vsel %vm796, %v787, -inf
      %1479 = vmax.xlane.f32.xlu0 %v1478
      %v1480 = vpop.xlane.xlu0 %1479
      %v1481 = vsel %vm796, %v788, -inf
      %1482 = vmax.xlane.f32.xlu0 %v1481
      %v1483 = vpop.xlane.xlu0 %1482
      %v1484 = vsel %vm796, %v789, -inf
      %1485 = vmax.xlane.f32.xlu0 %v1484
      %v1486 = vpop.xlane.xlu0 %1485
      %v1487 = vsel %vm796, %v790, -inf
      %1488 = vmax.xlane.f32.xlu0 %v1487
      %v1489 = vpop.xlane.xlu0 %1488
      %v1490 = vsel %vm796, %v791, -inf
      %1491 = vmax.xlane.f32.xlu0 %v1490
      %v1492 = vpop.xlane.xlu0 %1491
      %v1493 = vsel %vm796, %v792, -inf
      %1494 = vmax.xlane.f32.xlu0 %v1493
      %v1495 = vpop.xlane.xlu0 %1494
      %v1496 = vsel %vm796, %v793, -inf
      %1497 = vmax.xlane.f32.xlu0 %v1496
      %v1498 = vpop.xlane.xlu0 %1497
      %v1499 = vsel %vm796, %v794, -inf
      %1500 = vmax.xlane.f32.xlu0 %v1499
      %v1501 = vpop.xlane.xlu0 %1500
      %v1502 = vsel %vm796, %v795, -inf
      %1503 = vmax.xlane.f32.xlu0 %v1502
      %v1504 = vpop.xlane.xlu0 %1503
      %v1505 = vsub.f32 %v764, %v1411
      %v1506 = vsub.f32 %v765, %v1414
      %v1507 = vsub.f32 %v766, %v1417
      %v1508 = vsub.f32 %v767, %v1420
      %v1509 = vsub.f32 %v768, %v1423
      %v1510 = vsub.f32 %v769, %v1426
      %v1511 = vsub.f32 %v770, %v1429
      %v1512 = vsub.f32 %v771, %v1432
      %v1513 = vsub.f32 %v772, %v1435
      %v1514 = vsub.f32 %v773, %v1438
      %v1515 = vsub.f32 %v774, %v1441
      %v1516 = vsub.f32 %v775, %v1444
      %v1517 = vsub.f32 %v776, %v1447
      %v1518 = vsub.f32 %v777, %v1450
      %v1519 = vsub.f32 %v778, %v1453
      %v1520 = vsub.f32 %v779, %v1456
      %v1521 = vsub.f32 %v780, %v1459
      %v1522 = vsub.f32 %v781, %v1462
      %v1523 = vsub.f32 %v782, %v1465
      %v1524 = vsub.f32 %v783, %v1468
      %v1525 = vsub.f32 %v784, %v1471
      %v1526 = vsub.f32 %v785, %v1474
      %v1527 = vsub.f32 %v786, %v1477
      %v1528 = vsub.f32 %v787, %v1480
      %v1529 = vsub.f32 %v788, %v1483
      %v1530 = vsub.f32 %v789, %v1486
      %v1531 = vsub.f32 %v790, %v1489
      %v1532 = vsub.f32 %v791, %v1492
      %v1533 = vsub.f32 %v792, %v1495
      %v1534 = vsub.f32 %v793, %v1498
      %v1535 = vsub.f32 %v794, %v1501
      %v1536 = vsub.f32 %v795, %v1504
      %v1537 = vmul.f32 %v1505, 1.442695
      %v1538 = vpow.pop %v1537
      %v1539 = vmul.f32 %v1506, 1.442695
      %v1540 = vpow.pop %v1539
      %v1541 = vmul.f32 %v1507, 1.442695
      %v1542 = vpow.pop %v1541
      %v1543 = vmul.f32 %v1508, 1.442695
      %v1544 = vpow.pop %v1543
      %v1545 = vmul.f32 %v1509, 1.442695
      %v1546 = vpow.pop %v1545
      %v1547 = vmul.f32 %v1510, 1.442695
      %v1548 = vpow.pop %v1547
      %v1549 = vmul.f32 %v1511, 1.442695
      %v1550 = vpow.pop %v1549
      %v1551 = vmul.f32 %v1512, 1.442695
      %v1552 = vpow.pop %v1551
      %v1553 = vmul.f32 %v1513, 1.442695
      %v1554 = vpow.pop %v1553
      %v1555 = vmul.f32 %v1514, 1.442695
      %v1556 = vpow.pop %v1555
      %v1557 = vmul.f32 %v1515, 1.442695
      %v1558 = vpow.pop %v1557
      %v1559 = vmul.f32 %v1516, 1.442695
      %v1560 = vpow.pop %v1559
      %v1561 = vmul.f32 %v1517, 1.442695
      %v1562 = vpow.pop %v1561
      %v1563 = vmul.f32 %v1518, 1.442695
      %v1564 = vpow.pop %v1563
      %v1565 = vmul.f32 %v1519, 1.442695
      %v1566 = vpow.pop %v1565
      %v1567 = vmul.f32 %v1520, 1.442695
      %v1568 = vpow.pop %v1567
      %v1569 = vmul.f32 %v1521, 1.442695
      %v1570 = vpow.pop %v1569
      %v1571 = vmul.f32 %v1522, 1.442695
      %v1572 = vpow.pop %v1571
      %v1573 = vmul.f32 %v1523, 1.442695
      %v1574 = vpow.pop %v1573
      %v1575 = vmul.f32 %v1524, 1.442695
      %v1576 = vpow.pop %v1575
      %v1577 = vmul.f32 %v1525, 1.442695
      %v1578 = vpow.pop %v1577
      %v1579 = vmul.f32 %v1526, 1.442695
      %v1580 = vpow.pop %v1579
      %v1581 = vmul.f32 %v1527, 1.442695
      %v1582 = vpow.pop %v1581
      %v1583 = vmul.f32 %v1528, 1.442695
      %v1584 = vpow.pop %v1583
      %v1585 = vmul.f32 %v1529, 1.442695
      %v1586 = vpow.pop %v1585
      %v1587 = vmul.f32 %v1530, 1.442695
      %v1588 = vpow.pop %v1587
      %v1589 = vmul.f32 %v1531, 1.442695
      %v1590 = vpow.pop %v1589
      %v1591 = vmul.f32 %v1532, 1.442695
      %v1592 = vpow.pop %v1591
      %v1593 = vmul.f32 %v1533, 1.442695
      %v1594 = vpow.pop %v1593
      %v1595 = vmul.f32 %v1534, 1.442695
      %v1596 = vpow.pop %v1595
      %v1597 = vmul.f32 %v1535, 1.442695
      %v1598 = vpow.pop %v1597
      %v1599 = vmul.f32 %v1536, 1.442695
      %v1600 = vpow.pop %v1599
      %v1601 = vsel %vm796, %v1538, 0.0
      %1602 = vadd.xlane.f32.xlu0 %v1601
      %v1603 = vpop.xlane.xlu0 %1602
      %v1604 = vsel %vm796, %v1540, 0.0
      %1605 = vadd.xlane.f32.xlu0 %v1604
      %v1606 = vpop.xlane.xlu0 %1605
      %v1607 = vsel %vm796, %v1542, 0.0
      %1608 = vadd.xlane.f32.xlu0 %v1607
      %v1609 = vpop.xlane.xlu0 %1608
      %v1610 = vsel %vm796, %v1544, 0.0
      %1611 = vadd.xlane.f32.xlu0 %v1610
      %v1612 = vpop.xlane.xlu0 %1611
      %v1613 = vsel %vm796, %v1546, 0.0
      %1614 = vadd.xlane.f32.xlu0 %v1613
      %v1615 = vpop.xlane.xlu0 %1614
      %v1616 = vsel %vm796, %v1548, 0.0
      %1617 = vadd.xlane.f32.xlu0 %v1616
      %v1618 = vpop.xlane.xlu0 %1617
      %v1619 = vsel %vm796, %v1550, 0.0
      %1620 = vadd.xlane.f32.xlu0 %v1619
      %v1621 = vpop.xlane.xlu0 %1620
      %v1622 = vsel %vm796, %v1552, 0.0
      %1623 = vadd.xlane.f32.xlu0 %v1622
      %v1624 = vpop.xlane.xlu0 %1623
      %v1625 = vsel %vm796, %v1554, 0.0
      %1626 = vadd.xlane.f32.xlu0 %v1625
      %v1627 = vpop.xlane.xlu0 %1626
      %v1628 = vsel %vm796, %v1556, 0.0
      %1629 = vadd.xlane.f32.xlu0 %v1628
      %v1630 = vpop.xlane.xlu0 %1629
      %v1631 = vsel %vm796, %v1558, 0.0
      %1632 = vadd.xlane.f32.xlu0 %v1631
      %v1633 = vpop.xlane.xlu0 %1632
      %v1634 = vsel %vm796, %v1560, 0.0
      %1635 = vadd.xlane.f32.xlu0 %v1634
      %v1636 = vpop.xlane.xlu0 %1635
      %v1637 = vsel %vm796, %v1562, 0.0
      %1638 = vadd.xlane.f32.xlu0 %v1637
      %v1639 = vpop.xlane.xlu0 %1638
      %v1640 = vsel %vm796, %v1564, 0.0
      %1641 = vadd.xlane.f32.xlu0 %v1640
      %v1642 = vpop.xlane.xlu0 %1641
      %v1643 = vsel %vm796, %v1566, 0.0
      %1644 = vadd.xlane.f32.xlu0 %v1643
      %v1645 = vpop.xlane.xlu0 %1644
      %v1646 = vsel %vm796, %v1568, 0.0
      %1647 = vadd.xlane.f32.xlu0 %v1646
      %v1648 = vpop.xlane.xlu0 %1647
      %v1649 = vsel %vm796, %v1570, 0.0
      %1650 = vadd.xlane.f32.xlu0 %v1649
      %v1651 = vpop.xlane.xlu0 %1650
      %v1652 = vsel %vm796, %v1572, 0.0
      %1653 = vadd.xlane.f32.xlu0 %v1652
      %v1654 = vpop.xlane.xlu0 %1653
      %v1655 = vsel %vm796, %v1574, 0.0
      %1656 = vadd.xlane.f32.xlu0 %v1655
      %v1657 = vpop.xlane.xlu0 %1656
      %v1658 = vsel %vm796, %v1576, 0.0
      %1659 = vadd.xlane.f32.xlu0 %v1658
      %v1660 = vpop.xlane.xlu0 %1659
      %v1661 = vsel %vm796, %v1578, 0.0
      %1662 = vadd.xlane.f32.xlu0 %v1661
      %v1663 = vpop.xlane.xlu0 %1662
      %v1664 = vsel %vm796, %v1580, 0.0
      %1665 = vadd.xlane.f32.xlu0 %v1664
      %v1666 = vpop.xlane.xlu0 %1665
      %v1667 = vsel %vm796, %v1582, 0.0
      %1668 = vadd.xlane.f32.xlu0 %v1667
      %v1669 = vpop.xlane.xlu0 %1668
      %v1670 = vsel %vm796, %v1584, 0.0
      %1671 = vadd.xlane.f32.xlu0 %v1670
      %v1672 = vpop.xlane.xlu0 %1671
      %v1673 = vsel %vm796, %v1586, 0.0
      %1674 = vadd.xlane.f32.xlu0 %v1673
      %v1675 = vpop.xlane.xlu0 %1674
      %v1676 = vsel %vm796, %v1588, 0.0
      %1677 = vadd.xlane.f32.xlu0 %v1676
      %v1678 = vpop.xlane.xlu0 %1677
      %v1679 = vsel %vm796, %v1590, 0.0
      %1680 = vadd.xlane.f32.xlu0 %v1679
      %v1681 = vpop.xlane.xlu0 %1680
      %v1682 = vsel %vm796, %v1592, 0.0
      %1683 = vadd.xlane.f32.xlu0 %v1682
      %v1684 = vpop.xlane.xlu0 %1683
      %v1685 = vsel %vm796, %v1594, 0.0
      %1686 = vadd.xlane.f32.xlu0 %v1685
      %v1687 = vpop.xlane.xlu0 %1686
      %v1688 = vsel %vm796, %v1596, 0.0
      %1689 = vadd.xlane.f32.xlu0 %v1688
      %v1690 = vpop.xlane.xlu0 %1689
      %v1691 = vsel %vm796, %v1598, 0.0
      %1692 = vadd.xlane.f32.xlu0 %v1691
      %v1693 = vpop.xlane.xlu0 %1692
      %v1694 = vsel %vm796, %v1600, 0.0
      %1695 = vadd.xlane.f32.xlu0 %v1694
      %v1696 = vpop.xlane.xlu0 %1695
      %v1697 = vlaneseq
      %v1698 = vand.u32 %v1697, 127
      %v1699 = vcvt.s32.f32 %v1698
      %v1700 = vsub.f32 %v1699, 2.0
      %v1701 = vmul.f32 %v1538, %v1700
      %v1702 = vmul.f32 %v1540, %v1700
      %v1703 = vmul.f32 %v1542, %v1700
      %v1704 = vmul.f32 %v1544, %v1700
      %v1705 = vmul.f32 %v1546, %v1700
      %v1706 = vmul.f32 %v1548, %v1700
      %v1707 = vmul.f32 %v1550, %v1700
      %v1708 = vmul.f32 %v1552, %v1700
      %v1709 = vmul.f32 %v1554, %v1700
      %v1710 = vmul.f32 %v1556, %v1700
      %v1711 = vmul.f32 %v1558, %v1700
      %v1712 = vmul.f32 %v1560, %v1700
      %v1713 = vmul.f32 %v1562, %v1700
      %v1714 = vmul.f32 %v1564, %v1700
      %v1715 = vmul.f32 %v1566, %v1700
      %v1716 = vmul.f32 %v1568, %v1700
      %v1717 = vmul.f32 %v1570, %v1700
      %v1718 = vmul.f32 %v1572, %v1700
      %v1719 = vmul.f32 %v1574, %v1700
      %v1720 = vmul.f32 %v1576, %v1700
      %v1721 = vmul.f32 %v1578, %v1700
      %v1722 = vmul.f32 %v1580, %v1700
      %v1723 = vmul.f32 %v1582, %v1700
      %v1724 = vmul.f32 %v1584, %v1700
      %v1725 = vmul.f32 %v1586, %v1700
      %v1726 = vmul.f32 %v1588, %v1700
      %v1727 = vmul.f32 %v1590, %v1700
      %v1728 = vmul.f32 %v1592, %v1700
      %v1729 = vmul.f32 %v1594, %v1700
      %v1730 = vmul.f32 %v1596, %v1700
      %v1731 = vmul.f32 %v1598, %v1700
      %v1732 = vmul.f32 %v1600, %v1700
      %v1733 = vsel %vm796, %v1701, 0.0
      %1734 = vadd.xlane.f32.xlu0 %v1733
      %v1735 = vpop.xlane.xlu0 %1734
      %v1736 = vsel %vm796, %v1702, 0.0
      %1737 = vadd.xlane.f32.xlu0 %v1736
      %v1738 = vpop.xlane.xlu0 %1737
      %v1739 = vsel %vm796, %v1703, 0.0
      %1740 = vadd.xlane.f32.xlu0 %v1739
      %v1741 = vpop.xlane.xlu0 %1740
      %v1742 = vsel %vm796, %v1704, 0.0
      %1743 = vadd.xlane.f32.xlu0 %v1742
      %v1744 = vpop.xlane.xlu0 %1743
      %v1745 = vsel %vm796, %v1705, 0.0
      %1746 = vadd.xlane.f32.xlu0 %v1745
      %v1747 = vpop.xlane.xlu0 %1746
      %v1748 = vsel %vm796, %v1706, 0.0
      %1749 = vadd.xlane.f32.xlu0 %v1748
      %v1750 = vpop.xlane.xlu0 %1749
      %v1751 = vsel %vm796, %v1707, 0.0
      %1752 = vadd.xlane.f32.xlu0 %v1751
      %v1753 = vpop.xlane.xlu0 %1752
      %v1754 = vsel %vm796, %v1708, 0.0
      %1755 = vadd.xlane.f32.xlu0 %v1754
      %v1756 = vpop.xlane.xlu0 %1755
      %v1757 = vsel %vm796, %v1709, 0.0
      %1758 = vadd.xlane.f32.xlu0 %v1757
      %v1759 = vpop.xlane.xlu0 %1758
      %v1760 = vsel %vm796, %v1710, 0.0
      %1761 = vadd.xlane.f32.xlu0 %v1760
      %v1762 = vpop.xlane.xlu0 %1761
      %v1763 = vsel %vm796, %v1711, 0.0
      %1764 = vadd.xlane.f32.xlu0 %v1763
      %v1765 = vpop.xlane.xlu0 %1764
      %v1766 = vsel %vm796, %v1712, 0.0
      %1767 = vadd.xlane.f32.xlu0 %v1766
      %v1768 = vpop.xlane.xlu0 %1767
      %v1769 = vsel %vm796, %v1713, 0.0
      %1770 = vadd.xlane.f32.xlu0 %v1769
      %v1771 = vpop.xlane.xlu0 %1770
      %v1772 = vsel %vm796, %v1714, 0.0
      %1773 = vadd.xlane.f32.xlu0 %v1772
      %v1774 = vpop.xlane.xlu0 %1773
      %v1775 = vsel %vm796, %v1715, 0.0
      %1776 = vadd.xlane.f32.xlu0 %v1775
      %v1777 = vpop.xlane.xlu0 %1776
      %v1778 = vsel %vm796, %v1716, 0.0
      %1779 = vadd.xlane.f32.xlu0 %v1778
      %v1780 = vpop.xlane.xlu0 %1779
      %v1781 = vsel %vm796, %v1717, 0.0
      %1782 = vadd.xlane.f32.xlu0 %v1781
      %v1783 = vpop.xlane.xlu0 %1782
      %v1784 = vsel %vm796, %v1718, 0.0
      %1785 = vadd.xlane.f32.xlu0 %v1784
      %v1786 = vpop.xlane.xlu0 %1785
      %v1787 = vsel %vm796, %v1719, 0.0
      %1788 = vadd.xlane.f32.xlu0 %v1787
      %v1789 = vpop.xlane.xlu0 %1788
      %v1790 = vsel %vm796, %v1720, 0.0
      %1791 = vadd.xlane.f32.xlu0 %v1790
      %v1792 = vpop.xlane.xlu0 %1791
      %v1793 = vsel %vm796, %v1721, 0.0
      %1794 = vadd.xlane.f32.xlu0 %v1793
      %v1795 = vpop.xlane.xlu0 %1794
      %v1796 = vsel %vm796, %v1722, 0.0
      %1797 = vadd.xlane.f32.xlu0 %v1796
      %v1798 = vpop.xlane.xlu0 %1797
      %v1799 = vsel %vm796, %v1723, 0.0
      %1800 = vadd.xlane.f32.xlu0 %v1799
      %v1801 = vpop.xlane.xlu0 %1800
      %v1802 = vsel %vm796, %v1724, 0.0
      %1803 = vadd.xlane.f32.xlu0 %v1802
      %v1804 = vpop.xlane.xlu0 %1803
      %v1805 = vsel %vm796, %v1725, 0.0
      %1806 = vadd.xlane.f32.xlu0 %v1805
      %v1807 = vpop.xlane.xlu0 %1806
      %v1808 = vsel %vm796, %v1726, 0.0
      %1809 = vadd.xlane.f32.xlu0 %v1808
      %v1810 = vpop.xlane.xlu0 %1809
      %v1811 = vsel %vm796, %v1727, 0.0
      %1812 = vadd.xlane.f32.xlu0 %v1811
      %v1813 = vpop.xlane.xlu0 %1812
      %v1814 = vsel %vm796, %v1728, 0.0
      %1815 = vadd.xlane.f32.xlu0 %v1814
      %v1816 = vpop.xlane.xlu0 %1815
      %v1817 = vsel %vm796, %v1729, 0.0
      %1818 = vadd.xlane.f32.xlu0 %v1817
      %v1819 = vpop.xlane.xlu0 %1818
      %v1820 = vsel %vm796, %v1730, 0.0
      %1821 = vadd.xlane.f32.xlu0 %v1820
      %v1822 = vpop.xlane.xlu0 %1821
      %v1823 = vsel %vm796, %v1731, 0.0
      %1824 = vadd.xlane.f32.xlu0 %v1823
      %v1825 = vpop.xlane.xlu0 %1824
      %v1826 = vsel %vm796, %v1732, 0.0
      %1827 = vadd.xlane.f32.xlu0 %v1826
      %v1828 = vpop.xlane.xlu0 %1827
      %v1829 = vrcp.pop %v1603
      %v1830 = vmul.f32 %v1735, %v1829
      %v1831 = vrcp.pop %v1606
      %v1832 = vmul.f32 %v1738, %v1831
      %v1833 = vrcp.pop %v1609
      %v1834 = vmul.f32 %v1741, %v1833
      %v1835 = vrcp.pop %v1612
      %v1836 = vmul.f32 %v1744, %v1835
      %v1837 = vrcp.pop %v1615
      %v1838 = vmul.f32 %v1747, %v1837
      %v1839 = vrcp.pop %v1618
      %v1840 = vmul.f32 %v1750, %v1839
      %v1841 = vrcp.pop %v1621
      %v1842 = vmul.f32 %v1753, %v1841
      %v1843 = vrcp.pop %v1624
      %v1844 = vmul.f32 %v1756, %v1843
      %v1845 = vrcp.pop %v1627
      %v1846 = vmul.f32 %v1759, %v1845
      %v1847 = vrcp.pop %v1630
      %v1848 = vmul.f32 %v1762, %v1847
      %v1849 = vrcp.pop %v1633
      %v1850 = vmul.f32 %v1765, %v1849
      %v1851 = vrcp.pop %v1636
      %v1852 = vmul.f32 %v1768, %v1851
      %v1853 = vrcp.pop %v1639
      %v1854 = vmul.f32 %v1771, %v1853
      %v1855 = vrcp.pop %v1642
      %v1856 = vmul.f32 %v1774, %v1855
      %v1857 = vrcp.pop %v1645
      %v1858 = vmul.f32 %v1777, %v1857
      %v1859 = vrcp.pop %v1648
      %v1860 = vmul.f32 %v1780, %v1859
      %v1861 = vrcp.pop %v1651
      %v1862 = vmul.f32 %v1783, %v1861
      %v1863 = vrcp.pop %v1654
      %v1864 = vmul.f32 %v1786, %v1863
      %v1865 = vrcp.pop %v1657
      %v1866 = vmul.f32 %v1789, %v1865
      %v1867 = vrcp.pop %v1660
      %v1868 = vmul.f32 %v1792, %v1867
      %v1869 = vrcp.pop %v1663
      %v1870 = vmul.f32 %v1795, %v1869
      %v1871 = vrcp.pop %v1666
      %v1872 = vmul.f32 %v1798, %v1871
      %v1873 = vrcp.pop %v1669
      %v1874 = vmul.f32 %v1801, %v1873
      %v1875 = vrcp.pop %v1672
      %v1876 = vmul.f32 %v1804, %v1875
      %v1877 = vrcp.pop %v1675
      %v1878 = vmul.f32 %v1807, %v1877
      %v1879 = vrcp.pop %v1678
      %v1880 = vmul.f32 %v1810, %v1879
      %v1881 = vrcp.pop %v1681
      %v1882 = vmul.f32 %v1813, %v1881
      %v1883 = vrcp.pop %v1684
      %v1884 = vmul.f32 %v1816, %v1883
      %v1885 = vrcp.pop %v1687
      %v1886 = vmul.f32 %v1819, %v1885
      %v1887 = vrcp.pop %v1690
      %v1888 = vmul.f32 %v1822, %v1887
      %v1889 = vrcp.pop %v1693
      %v1890 = vmul.f32 %v1825, %v1889
      %v1891 = vrcp.pop %v1696
      %v1892 = vmul.f32 %v1828, %v1891
      %v1893 = vsel %vm796, %v1377, -inf
      %1894 = vmax.xlane.f32.xlu0 %v1893
      %v1895 = vpop.xlane.xlu0 %1894
      %v1896 = vsel %vm796, %v1378, -inf
      %1897 = vmax.xlane.f32.xlu0 %v1896
      %v1898 = vpop.xlane.xlu0 %1897
      %v1899 = vsel %vm796, %v1379, -inf
      %1900 = vmax.xlane.f32.xlu0 %v1899
      %v1901 = vpop.xlane.xlu0 %1900
      %v1902 = vsel %vm796, %v1380, -inf
      %1903 = vmax.xlane.f32.xlu0 %v1902
      %v1904 = vpop.xlane.xlu0 %1903
      %v1905 = vsel %vm796, %v1381, -inf
      %1906 = vmax.xlane.f32.xlu0 %v1905
      %v1907 = vpop.xlane.xlu0 %1906
      %v1908 = vsel %vm796, %v1382, -inf
      %1909 = vmax.xlane.f32.xlu0 %v1908
      %v1910 = vpop.xlane.xlu0 %1909
      %v1911 = vsel %vm796, %v1383, -inf
      %1912 = vmax.xlane.f32.xlu0 %v1911
      %v1913 = vpop.xlane.xlu0 %1912
      %v1914 = vsel %vm796, %v1384, -inf
      %1915 = vmax.xlane.f32.xlu0 %v1914
      %v1916 = vpop.xlane.xlu0 %1915
      %v1917 = vsel %vm796, %v1385, -inf
      %1918 = vmax.xlane.f32.xlu0 %v1917
      %v1919 = vpop.xlane.xlu0 %1918
      %v1920 = vsel %vm796, %v1386, -inf
      %1921 = vmax.xlane.f32.xlu0 %v1920
      %v1922 = vpop.xlane.xlu0 %1921
      %v1923 = vsel %vm796, %v1387, -inf
      %1924 = vmax.xlane.f32.xlu0 %v1923
      %v1925 = vpop.xlane.xlu0 %1924
      %v1926 = vsel %vm796, %v1388, -inf
      %1927 = vmax.xlane.f32.xlu0 %v1926
      %v1928 = vpop.xlane.xlu0 %1927
      %v1929 = vsel %vm796, %v1389, -inf
      %1930 = vmax.xlane.f32.xlu0 %v1929
      %v1931 = vpop.xlane.xlu0 %1930
      %v1932 = vsel %vm796, %v1390, -inf
      %1933 = vmax.xlane.f32.xlu0 %v1932
      %v1934 = vpop.xlane.xlu0 %1933
      %v1935 = vsel %vm796, %v1391, -inf
      %1936 = vmax.xlane.f32.xlu0 %v1935
      %v1937 = vpop.xlane.xlu0 %1936
      %v1938 = vsel %vm796, %v1392, -inf
      %1939 = vmax.xlane.f32.xlu0 %v1938
      %v1940 = vpop.xlane.xlu0 %1939
      %v1941 = vsel %vm796, %v1393, -inf
      %1942 = vmax.xlane.f32.xlu0 %v1941
      %v1943 = vpop.xlane.xlu0 %1942
      %v1944 = vsel %vm796, %v1394, -inf
      %1945 = vmax.xlane.f32.xlu0 %v1944
      %v1946 = vpop.xlane.xlu0 %1945
      %v1947 = vsel %vm796, %v1395, -inf
      %1948 = vmax.xlane.f32.xlu0 %v1947
      %v1949 = vpop.xlane.xlu0 %1948
      %v1950 = vsel %vm796, %v1396, -inf
      %1951 = vmax.xlane.f32.xlu0 %v1950
      %v1952 = vpop.xlane.xlu0 %1951
      %v1953 = vsel %vm796, %v1397, -inf
      %1954 = vmax.xlane.f32.xlu0 %v1953
      %v1955 = vpop.xlane.xlu0 %1954
      %v1956 = vsel %vm796, %v1398, -inf
      %1957 = vmax.xlane.f32.xlu0 %v1956
      %v1958 = vpop.xlane.xlu0 %1957
      %v1959 = vsel %vm796, %v1399, -inf
      %1960 = vmax.xlane.f32.xlu0 %v1959
      %v1961 = vpop.xlane.xlu0 %1960
      %v1962 = vsel %vm796, %v1400, -inf
      %1963 = vmax.xlane.f32.xlu0 %v1962
      %v1964 = vpop.xlane.xlu0 %1963
      %v1965 = vsel %vm796, %v1401, -inf
      %1966 = vmax.xlane.f32.xlu0 %v1965
      %v1967 = vpop.xlane.xlu0 %1966
      %v1968 = vsel %vm796, %v1402, -inf
      %1969 = vmax.xlane.f32.xlu0 %v1968
      %v1970 = vpop.xlane.xlu0 %1969
      %v1971 = vsel %vm796, %v1403, -inf
      %1972 = vmax.xlane.f32.xlu0 %v1971
      %v1973 = vpop.xlane.xlu0 %1972
      %v1974 = vsel %vm796, %v1404, -inf
      %1975 = vmax.xlane.f32.xlu0 %v1974
      %v1976 = vpop.xlane.xlu0 %1975
      %v1977 = vsel %vm796, %v1405, -inf
      %1978 = vmax.xlane.f32.xlu0 %v1977
      %v1979 = vpop.xlane.xlu0 %1978
      %v1980 = vsel %vm796, %v1406, -inf
      %1981 = vmax.xlane.f32.xlu0 %v1980
      %v1982 = vpop.xlane.xlu0 %1981
      %v1983 = vsel %vm796, %v1407, -inf
      %1984 = vmax.xlane.f32.xlu0 %v1983
      %v1985 = vpop.xlane.xlu0 %1984
      %v1986 = vsel %vm796, %v1408, -inf
      %1987 = vmax.xlane.f32.xlu0 %v1986
      %v1988 = vpop.xlane.xlu0 %1987
      %v1989 = vsub.f32 %v1377, %v1895
      %v1990 = vsub.f32 %v1378, %v1898
      %v1991 = vsub.f32 %v1379, %v1901
      %v1992 = vsub.f32 %v1380, %v1904
      %v1993 = vsub.f32 %v1381, %v1907
      %v1994 = vsub.f32 %v1382, %v1910
      %v1995 = vsub.f32 %v1383, %v1913
      %v1996 = vsub.f32 %v1384, %v1916
      %v1997 = vsub.f32 %v1385, %v1919
      %v1998 = vsub.f32 %v1386, %v1922
      %v1999 = vsub.f32 %v1387, %v1925
      %v2000 = vsub.f32 %v1388, %v1928
      %v2001 = vsub.f32 %v1389, %v1931
      %v2002 = vsub.f32 %v1390, %v1934
      %v2003 = vsub.f32 %v1391, %v1937
      %v2004 = vsub.f32 %v1392, %v1940
      %v2005 = vsub.f32 %v1393, %v1943
      %v2006 = vsub.f32 %v1394, %v1946
      %v2007 = vsub.f32 %v1395, %v1949
      %v2008 = vsub.f32 %v1396, %v1952
      %v2009 = vsub.f32 %v1397, %v1955
      %v2010 = vsub.f32 %v1398, %v1958
      %v2011 = vsub.f32 %v1399, %v1961
      %v2012 = vsub.f32 %v1400, %v1964
      %v2013 = vsub.f32 %v1401, %v1967
      %v2014 = vsub.f32 %v1402, %v1970
      %v2015 = vsub.f32 %v1403, %v1973
      %v2016 = vsub.f32 %v1404, %v1976
      %v2017 = vsub.f32 %v1405, %v1979
      %v2018 = vsub.f32 %v1406, %v1982
      %v2019 = vsub.f32 %v1407, %v1985
      %v2020 = vsub.f32 %v1408, %v1988
      %v2021 = vmul.f32 %v1989, 1.442695
      %v2022 = vpow.pop %v2021
      %v2023 = vmul.f32 %v1990, 1.442695
      %v2024 = vpow.pop %v2023
      %v2025 = vmul.f32 %v1991, 1.442695
      %v2026 = vpow.pop %v2025
      %v2027 = vmul.f32 %v1992, 1.442695
      %v2028 = vpow.pop %v2027
      %v2029 = vmul.f32 %v1993, 1.442695
      %v2030 = vpow.pop %v2029
      %v2031 = vmul.f32 %v1994, 1.442695
      %v2032 = vpow.pop %v2031
      %v2033 = vmul.f32 %v1995, 1.442695
      %v2034 = vpow.pop %v2033
      %v2035 = vmul.f32 %v1996, 1.442695
      %v2036 = vpow.pop %v2035
      %v2037 = vmul.f32 %v1997, 1.442695
      %v2038 = vpow.pop %v2037
      %v2039 = vmul.f32 %v1998, 1.442695
      %v2040 = vpow.pop %v2039
      %v2041 = vmul.f32 %v1999, 1.442695
      %v2042 = vpow.pop %v2041
      %v2043 = vmul.f32 %v2000, 1.442695
      %v2044 = vpow.pop %v2043
      %v2045 = vmul.f32 %v2001, 1.442695
      %v2046 = vpow.pop %v2045
      %v2047 = vmul.f32 %v2002, 1.442695
      %v2048 = vpow.pop %v2047
      %v2049 = vmul.f32 %v2003, 1.442695
      %v2050 = vpow.pop %v2049
      %v2051 = vmul.f32 %v2004, 1.442695
      %v2052 = vpow.pop %v2051
      %v2053 = vmul.f32 %v2005, 1.442695
      %v2054 = vpow.pop %v2053
      %v2055 = vmul.f32 %v2006, 1.442695
      %v2056 = vpow.pop %v2055
      %v2057 = vmul.f32 %v2007, 1.442695
      %v2058 = vpow.pop %v2057
      %v2059 = vmul.f32 %v2008, 1.442695
      %v2060 = vpow.pop %v2059
      %v2061 = vmul.f32 %v2009, 1.442695
      %v2062 = vpow.pop %v2061
      %v2063 = vmul.f32 %v2010, 1.442695
      %v2064 = vpow.pop %v2063
      %v2065 = vmul.f32 %v2011, 1.442695
      %v2066 = vpow.pop %v2065
      %v2067 = vmul.f32 %v2012, 1.442695
      %v2068 = vpow.pop %v2067
      %v2069 = vmul.f32 %v2013, 1.442695
      %v2070 = vpow.pop %v2069
      %v2071 = vmul.f32 %v2014, 1.442695
      %v2072 = vpow.pop %v2071
      %v2073 = vmul.f32 %v2015, 1.442695
      %v2074 = vpow.pop %v2073
      %v2075 = vmul.f32 %v2016, 1.442695
      %v2076 = vpow.pop %v2075
      %v2077 = vmul.f32 %v2017, 1.442695
      %v2078 = vpow.pop %v2077
      %v2079 = vmul.f32 %v2018, 1.442695
      %v2080 = vpow.pop %v2079
      %v2081 = vmul.f32 %v2019, 1.442695
      %v2082 = vpow.pop %v2081
      %v2083 = vmul.f32 %v2020, 1.442695
      %v2084 = vpow.pop %v2083
      %v2085 = vsel %vm796, %v2022, 0.0
      %2086 = vadd.xlane.f32.xlu0 %v2085
      %v2087 = vpop.xlane.xlu0 %2086
      %v2088 = vsel %vm796, %v2024, 0.0
      %2089 = vadd.xlane.f32.xlu0 %v2088
      %v2090 = vpop.xlane.xlu0 %2089
      %v2091 = vsel %vm796, %v2026, 0.0
      %2092 = vadd.xlane.f32.xlu0 %v2091
      %v2093 = vpop.xlane.xlu0 %2092
      %v2094 = vsel %vm796, %v2028, 0.0
      %2095 = vadd.xlane.f32.xlu0 %v2094
      %v2096 = vpop.xlane.xlu0 %2095
      %v2097 = vsel %vm796, %v2030, 0.0
      %2098 = vadd.xlane.f32.xlu0 %v2097
      %v2099 = vpop.xlane.xlu0 %2098
      %v2100 = vsel %vm796, %v2032, 0.0
      %2101 = vadd.xlane.f32.xlu0 %v2100
      %v2102 = vpop.xlane.xlu0 %2101
      %v2103 = vsel %vm796, %v2034, 0.0
      %2104 = vadd.xlane.f32.xlu0 %v2103
      %v2105 = vpop.xlane.xlu0 %2104
      %v2106 = vsel %vm796, %v2036, 0.0
      %2107 = vadd.xlane.f32.xlu0 %v2106
      %v2108 = vpop.xlane.xlu0 %2107
      %v2109 = vsel %vm796, %v2038, 0.0
      %2110 = vadd.xlane.f32.xlu0 %v2109
      %v2111 = vpop.xlane.xlu0 %2110
      %v2112 = vsel %vm796, %v2040, 0.0
      %2113 = vadd.xlane.f32.xlu0 %v2112
      %v2114 = vpop.xlane.xlu0 %2113
      %v2115 = vsel %vm796, %v2042, 0.0
      %2116 = vadd.xlane.f32.xlu0 %v2115
      %v2117 = vpop.xlane.xlu0 %2116
      %v2118 = vsel %vm796, %v2044, 0.0
      %2119 = vadd.xlane.f32.xlu0 %v2118
      %v2120 = vpop.xlane.xlu0 %2119
      %v2121 = vsel %vm796, %v2046, 0.0
      %2122 = vadd.xlane.f32.xlu0 %v2121
      %v2123 = vpop.xlane.xlu0 %2122
      %v2124 = vsel %vm796, %v2048, 0.0
      %2125 = vadd.xlane.f32.xlu0 %v2124
      %v2126 = vpop.xlane.xlu0 %2125
      %v2127 = vsel %vm796, %v2050, 0.0
      %2128 = vadd.xlane.f32.xlu0 %v2127
      %v2129 = vpop.xlane.xlu0 %2128
      %v2130 = vsel %vm796, %v2052, 0.0
      %2131 = vadd.xlane.f32.xlu0 %v2130
      %v2132 = vpop.xlane.xlu0 %2131
      %v2133 = vsel %vm796, %v2054, 0.0
      %2134 = vadd.xlane.f32.xlu0 %v2133
      %v2135 = vpop.xlane.xlu0 %2134
      %v2136 = vsel %vm796, %v2056, 0.0
      %2137 = vadd.xlane.f32.xlu0 %v2136
      %v2138 = vpop.xlane.xlu0 %2137
      %v2139 = vsel %vm796, %v2058, 0.0
      %2140 = vadd.xlane.f32.xlu0 %v2139
      %v2141 = vpop.xlane.xlu0 %2140
      %v2142 = vsel %vm796, %v2060, 0.0
      %2143 = vadd.xlane.f32.xlu0 %v2142
      %v2144 = vpop.xlane.xlu0 %2143
      %v2145 = vsel %vm796, %v2062, 0.0
      %2146 = vadd.xlane.f32.xlu0 %v2145
      %v2147 = vpop.xlane.xlu0 %2146
      %v2148 = vsel %vm796, %v2064, 0.0
      %2149 = vadd.xlane.f32.xlu0 %v2148
      %v2150 = vpop.xlane.xlu0 %2149
      %v2151 = vsel %vm796, %v2066, 0.0
      %2152 = vadd.xlane.f32.xlu0 %v2151
      %v2153 = vpop.xlane.xlu0 %2152
      %v2154 = vsel %vm796, %v2068, 0.0
      %2155 = vadd.xlane.f32.xlu0 %v2154
      %v2156 = vpop.xlane.xlu0 %2155
      %v2157 = vsel %vm796, %v2070, 0.0
      %2158 = vadd.xlane.f32.xlu0 %v2157
      %v2159 = vpop.xlane.xlu0 %2158
      %v2160 = vsel %vm796, %v2072, 0.0
      %2161 = vadd.xlane.f32.xlu0 %v2160
      %v2162 = vpop.xlane.xlu0 %2161
      %v2163 = vsel %vm796, %v2074, 0.0
      %2164 = vadd.xlane.f32.xlu0 %v2163
      %v2165 = vpop.xlane.xlu0 %2164
      %v2166 = vsel %vm796, %v2076, 0.0
      %2167 = vadd.xlane.f32.xlu0 %v2166
      %v2168 = vpop.xlane.xlu0 %2167
      %v2169 = vsel %vm796, %v2078, 0.0
      %2170 = vadd.xlane.f32.xlu0 %v2169
      %v2171 = vpop.xlane.xlu0 %2170
      %v2172 = vsel %vm796, %v2080, 0.0
      %2173 = vadd.xlane.f32.xlu0 %v2172
      %v2174 = vpop.xlane.xlu0 %2173
      %v2175 = vsel %vm796, %v2082, 0.0
      %2176 = vadd.xlane.f32.xlu0 %v2175
      %v2177 = vpop.xlane.xlu0 %2176
      %v2178 = vsel %vm796, %v2084, 0.0
      %2179 = vadd.xlane.f32.xlu0 %v2178
      %v2180 = vpop.xlane.xlu0 %2179
      %v2181 = vmul.f32 %v2022, %v1700
      %v2182 = vmul.f32 %v2024, %v1700
      %v2183 = vmul.f32 %v2026, %v1700
      %v2184 = vmul.f32 %v2028, %v1700
      %v2185 = vmul.f32 %v2030, %v1700
      %v2186 = vmul.f32 %v2032, %v1700
      %v2187 = vmul.f32 %v2034, %v1700
      %v2188 = vmul.f32 %v2036, %v1700
      %v2189 = vmul.f32 %v2038, %v1700
      %v2190 = vmul.f32 %v2040, %v1700
      %v2191 = vmul.f32 %v2042, %v1700
      %v2192 = vmul.f32 %v2044, %v1700
      %v2193 = vmul.f32 %v2046, %v1700
      %v2194 = vmul.f32 %v2048, %v1700
      %v2195 = vmul.f32 %v2050, %v1700
      %v2196 = vmul.f32 %v2052, %v1700
      %v2197 = vmul.f32 %v2054, %v1700
      %v2198 = vmul.f32 %v2056, %v1700
      %v2199 = vmul.f32 %v2058, %v1700
      %v2200 = vmul.f32 %v2060, %v1700
      %v2201 = vmul.f32 %v2062, %v1700
      %v2202 = vmul.f32 %v2064, %v1700
      %v2203 = vmul.f32 %v2066, %v1700
      %v2204 = vmul.f32 %v2068, %v1700
      %v2205 = vmul.f32 %v2070, %v1700
      %v2206 = vmul.f32 %v2072, %v1700
      %v2207 = vmul.f32 %v2074, %v1700
      %v2208 = vmul.f32 %v2076, %v1700
      %v2209 = vmul.f32 %v2078, %v1700
      %v2210 = vmul.f32 %v2080, %v1700
      %v2211 = vmul.f32 %v2082, %v1700
      %v2212 = vmul.f32 %v2084, %v1700
      %v2213 = vsel %vm796, %v2181, 0.0
      %2214 = vadd.xlane.f32.xlu0 %v2213
      %v2215 = vpop.xlane.xlu0 %2214
      %v2216 = vsel %vm796, %v2182, 0.0
      %2217 = vadd.xlane.f32.xlu0 %v2216
      %v2218 = vpop.xlane.xlu0 %2217
      %v2219 = vsel %vm796, %v2183, 0.0
      %2220 = vadd.xlane.f32.xlu0 %v2219
      %v2221 = vpop.xlane.xlu0 %2220
      %v2222 = vsel %vm796, %v2184, 0.0
      %2223 = vadd.xlane.f32.xlu0 %v2222
      %v2224 = vpop.xlane.xlu0 %2223
      %v2225 = vsel %vm796, %v2185, 0.0
      %2226 = vadd.xlane.f32.xlu0 %v2225
      %v2227 = vpop.xlane.xlu0 %2226
      %v2228 = vsel %vm796, %v2186, 0.0
      %2229 = vadd.xlane.f32.xlu0 %v2228
      %v2230 = vpop.xlane.xlu0 %2229
      %v2231 = vsel %vm796, %v2187, 0.0
      %2232 = vadd.xlane.f32.xlu0 %v2231
      %v2233 = vpop.xlane.xlu0 %2232
      %v2234 = vsel %vm796, %v2188, 0.0
      %2235 = vadd.xlane.f32.xlu0 %v2234
      %v2236 = vpop.xlane.xlu0 %2235
      %v2237 = vsel %vm796, %v2189, 0.0
      %2238 = vadd.xlane.f32.xlu0 %v2237
      %v2239 = vpop.xlane.xlu0 %2238
      %v2240 = vsel %vm796, %v2190, 0.0
      %2241 = vadd.xlane.f32.xlu0 %v2240
      %v2242 = vpop.xlane.xlu0 %2241
      %v2243 = vsel %vm796, %v2191, 0.0
      %2244 = vadd.xlane.f32.xlu0 %v2243
      %v2245 = vpop.xlane.xlu0 %2244
      %v2246 = vsel %vm796, %v2192, 0.0
      %2247 = vadd.xlane.f32.xlu0 %v2246
      %v2248 = vpop.xlane.xlu0 %2247
      %v2249 = vsel %vm796, %v2193, 0.0
      %2250 = vadd.xlane.f32.xlu0 %v2249
      %v2251 = vpop.xlane.xlu0 %2250
      %v2252 = vsel %vm796, %v2194, 0.0
      %2253 = vadd.xlane.f32.xlu0 %v2252
      %v2254 = vpop.xlane.xlu0 %2253
      %v2255 = vsel %vm796, %v2195, 0.0
      %2256 = vadd.xlane.f32.xlu0 %v2255
      %v2257 = vpop.xlane.xlu0 %2256
      %v2258 = vsel %vm796, %v2196, 0.0
      %2259 = vadd.xlane.f32.xlu0 %v2258
      %v2260 = vpop.xlane.xlu0 %2259
      %v2261 = vsel %vm796, %v2197, 0.0
      %2262 = vadd.xlane.f32.xlu0 %v2261
      %v2263 = vpop.xlane.xlu0 %2262
      %v2264 = vsel %vm796, %v2198, 0.0
      %2265 = vadd.xlane.f32.xlu0 %v2264
      %v2266 = vpop.xlane.xlu0 %2265
      %v2267 = vsel %vm796, %v2199, 0.0
      %2268 = vadd.xlane.f32.xlu0 %v2267
      %v2269 = vpop.xlane.xlu0 %2268
      %v2270 = vsel %vm796, %v2200, 0.0
      %2271 = vadd.xlane.f32.xlu0 %v2270
      %v2272 = vpop.xlane.xlu0 %2271
      %v2273 = vsel %vm796, %v2201, 0.0
      %2274 = vadd.xlane.f32.xlu0 %v2273
      %v2275 = vpop.xlane.xlu0 %2274
      %v2276 = vsel %vm796, %v2202, 0.0
      %2277 = vadd.xlane.f32.xlu0 %v2276
      %v2278 = vpop.xlane.xlu0 %2277
      %v2279 = vsel %vm796, %v2203, 0.0
      %2280 = vadd.xlane.f32.xlu0 %v2279
      %v2281 = vpop.xlane.xlu0 %2280
      %v2282 = vsel %vm796, %v2204, 0.0
      %2283 = vadd.xlane.f32.xlu0 %v2282
      %v2284 = vpop.xlane.xlu0 %2283
      %v2285 = vsel %vm796, %v2205, 0.0
      %2286 = vadd.xlane.f32.xlu0 %v2285
      %v2287 = vpop.xlane.xlu0 %2286
      %v2288 = vsel %vm796, %v2206, 0.0
      %2289 = vadd.xlane.f32.xlu0 %v2288
      %v2290 = vpop.xlane.xlu0 %2289
      %v2291 = vsel %vm796, %v2207, 0.0
      %2292 = vadd.xlane.f32.xlu0 %v2291
      %v2293 = vpop.xlane.xlu0 %2292
      %v2294 = vsel %vm796, %v2208, 0.0
      %2295 = vadd.xlane.f32.xlu0 %v2294
      %v2296 = vpop.xlane.xlu0 %2295
      %v2297 = vsel %vm796, %v2209, 0.0
      %2298 = vadd.xlane.f32.xlu0 %v2297
      %v2299 = vpop.xlane.xlu0 %2298
      %v2300 = vsel %vm796, %v2210, 0.0
      %2301 = vadd.xlane.f32.xlu0 %v2300
      %v2302 = vpop.xlane.xlu0 %2301
      %v2303 = vsel %vm796, %v2211, 0.0
      %2304 = vadd.xlane.f32.xlu0 %v2303
      %v2305 = vpop.xlane.xlu0 %2304
      %v2306 = vsel %vm796, %v2212, 0.0
      %2307 = vadd.xlane.f32.xlu0 %v2306
      %v2308 = vpop.xlane.xlu0 %2307
      %v2309 = vrcp.pop %v2087
      %v2310 = vmul.f32 %v2215, %v2309
      %v2311 = vrcp.pop %v2090
      %v2312 = vmul.f32 %v2218, %v2311
      %v2313 = vrcp.pop %v2093
      %v2314 = vmul.f32 %v2221, %v2313
      %v2315 = vrcp.pop %v2096
      %v2316 = vmul.f32 %v2224, %v2315
      %v2317 = vrcp.pop %v2099
      %v2318 = vmul.f32 %v2227, %v2317
      %v2319 = vrcp.pop %v2102
      %v2320 = vmul.f32 %v2230, %v2319
      %v2321 = vrcp.pop %v2105
      %v2322 = vmul.f32 %v2233, %v2321
      %v2323 = vrcp.pop %v2108
      %v2324 = vmul.f32 %v2236, %v2323
      %v2325 = vrcp.pop %v2111
      %v2326 = vmul.f32 %v2239, %v2325
      %v2327 = vrcp.pop %v2114
      %v2328 = vmul.f32 %v2242, %v2327
      %v2329 = vrcp.pop %v2117
      %v2330 = vmul.f32 %v2245, %v2329
      %v2331 = vrcp.pop %v2120
      %v2332 = vmul.f32 %v2248, %v2331
      %v2333 = vrcp.pop %v2123
      %v2334 = vmul.f32 %v2251, %v2333
      %v2335 = vrcp.pop %v2126
      %v2336 = vmul.f32 %v2254, %v2335
      %v2337 = vrcp.pop %v2129
      %v2338 = vmul.f32 %v2257, %v2337
      %v2339 = vrcp.pop %v2132
      %v2340 = vmul.f32 %v2260, %v2339
      %v2341 = vrcp.pop %v2135
      %v2342 = vmul.f32 %v2263, %v2341
      %v2343 = vrcp.pop %v2138
      %v2344 = vmul.f32 %v2266, %v2343
      %v2345 = vrcp.pop %v2141
      %v2346 = vmul.f32 %v2269, %v2345
      %v2347 = vrcp.pop %v2144
      %v2348 = vmul.f32 %v2272, %v2347
      %v2349 = vrcp.pop %v2147
      %v2350 = vmul.f32 %v2275, %v2349
      %v2351 = vrcp.pop %v2150
      %v2352 = vmul.f32 %v2278, %v2351
      %v2353 = vrcp.pop %v2153
      %v2354 = vmul.f32 %v2281, %v2353
      %v2355 = vrcp.pop %v2156
      %v2356 = vmul.f32 %v2284, %v2355
      %v2357 = vrcp.pop %v2159
      %v2358 = vmul.f32 %v2287, %v2357
      %v2359 = vrcp.pop %v2162
      %v2360 = vmul.f32 %v2290, %v2359
      %v2361 = vrcp.pop %v2165
      %v2362 = vmul.f32 %v2293, %v2361
      %v2363 = vrcp.pop %v2168
      %v2364 = vmul.f32 %v2296, %v2363
      %v2365 = vrcp.pop %v2171
      %v2366 = vmul.f32 %v2299, %v2365
      %v2367 = vrcp.pop %v2174
      %v2368 = vmul.f32 %v2302, %v2367
      %v2369 = vrcp.pop %v2177
      %v2370 = vmul.f32 %v2305, %v2369
      %v2371 = vrcp.pop %v2180
      %v2372 = vmul.f32 %v2308, %v2371
      %v2373 = vsel %vm1277, %v1830, %v2310
      %v2374 = vsel %vm1277, %v1832, %v2312
      %v2375 = vsel %vm1277, %v1834, %v2314
      %v2376 = vsel %vm1277, %v1836, %v2316
      %v2377 = vsel %vm1277, %v1838, %v2318
      %v2378 = vsel %vm1277, %v1840, %v2320
      %v2379 = vsel %vm1277, %v1842, %v2322
      %v2380 = vsel %vm1277, %v1844, %v2324
      %v2381 = vsel %vm1277, %v1846, %v2326
      %v2382 = vsel %vm1277, %v1848, %v2328
      %v2383 = vsel %vm1277, %v1850, %v2330
      %v2384 = vsel %vm1277, %v1852, %v2332
      %v2385 = vsel %vm1277, %v1854, %v2334
      %v2386 = vsel %vm1277, %v1856, %v2336
      %v2387 = vsel %vm1277, %v1858, %v2338
      %v2388 = vsel %vm1277, %v1860, %v2340
      %v2389 = vsel %vm1277, %v1862, %v2342
      %v2390 = vsel %vm1277, %v1864, %v2344
      %v2391 = vsel %vm1277, %v1866, %v2346
      %v2392 = vsel %vm1277, %v1868, %v2348
      %v2393 = vsel %vm1277, %v1870, %v2350
      %v2394 = vsel %vm1277, %v1872, %v2352
      %v2395 = vsel %vm1277, %v1874, %v2354
      %v2396 = vsel %vm1277, %v1876, %v2356
      %v2397 = vsel %vm1277, %v1878, %v2358
      %v2398 = vsel %vm1277, %v1880, %v2360
      %v2399 = vsel %vm1277, %v1882, %v2362
      %v2400 = vsel %vm1277, %v1884, %v2364
      %v2401 = vsel %vm1277, %v1886, %v2366
      %v2402 = vsel %vm1277, %v1888, %v2368
      %v2403 = vsel %vm1277, %v1890, %v2370
      %v2404 = vsel %vm1277, %v1892, %v2372
      %2405 = vst.msk [vmem:[%s154] sm:$0xff] %vm1310, %v2373
      %2406 = vst.msk [vmem:[%s154 + $0x8] sm:$0xff] %vm1310, %v2374
      %2407 = vst.msk [vmem:[%s154 + $0x10] sm:$0xff] %vm1310, %v2375
      %2408 = vst.msk [vmem:[%s154 + $0x18] sm:$0xff] %vm1310, %v2376
      %2409 = vst.msk [vmem:[%s154 + $0x20] sm:$0xff] %vm1310, %v2377
      %2410 = vst.msk [vmem:[%s154 + $0x28] sm:$0xff] %vm1310, %v2378
      %2411 = vst.msk [vmem:[%s154 + $0x30] sm:$0xff] %vm1310, %v2379
      %2412 = vst.msk [vmem:[%s154 + $0x38] sm:$0xff] %vm1310, %v2380
      %2413 = vst.msk [vmem:[%s154 + $0x40] sm:$0xff] %vm1310, %v2381
      %2414 = vst.msk [vmem:[%s154 + $0x48] sm:$0xff] %vm1310, %v2382
      %2415 = vst.msk [vmem:[%s154 + $0x50] sm:$0xff] %vm1310, %v2383
      %2416 = vst.msk [vmem:[%s154 + $0x58] sm:$0xff] %vm1310, %v2384
      %2417 = vst.msk [vmem:[%s154 + $0x60] sm:$0xff] %vm1310, %v2385
      %2418 = vst.msk [vmem:[%s154 + $0x68] sm:$0xff] %vm1310, %v2386
      %2419 = vst.msk [vmem:[%s154 + $0x70] sm:$0xff] %vm1310, %v2387
      %2420 = vst.msk [vmem:[%s154 + $0x78] sm:$0xff] %vm1310, %v2388
      %2421 = vst.msk [vmem:[%s154 + $0x80] sm:$0xff] %vm1310, %v2389
      %2422 = vst.msk [vmem:[%s154 + $0x88] sm:$0xff] %vm1310, %v2390
      %2423 = vst.msk [vmem:[%s154 + $0x90] sm:$0xff] %vm1310, %v2391
      %2424 = vst.msk [vmem:[%s154 + $0x98] sm:$0xff] %vm1310, %v2392
      %2425 = vst.msk [vmem:[%s154 + $0xa0] sm:$0xff] %vm1310, %v2393
      %2426 = vst.msk [vmem:[%s154 + $0xa8] sm:$0xff] %vm1310, %v2394
      %2427 = vst.msk [vmem:[%s154 + $0xb0] sm:$0xff] %vm1310, %v2395
      %2428 = vst.msk [vmem:[%s154 + $0xb8] sm:$0xff] %vm1310, %v2396
      %2429 = vst.msk [vmem:[%s154 + $0xc0] sm:$0xff] %vm1310, %v2397
      %2430 = vst.msk [vmem:[%s154 + $0xc8] sm:$0xff] %vm1310, %v2398
      %2431 = vst.msk [vmem:[%s154 + $0xd0] sm:$0xff] %vm1310, %v2399
      %2432 = vst.msk [vmem:[%s154 + $0xd8] sm:$0xff] %vm1310, %v2400
      %2433 = vst.msk [vmem:[%s154 + $0xe0] sm:$0xff] %vm1310, %v2401
      %2434 = vst.msk [vmem:[%s154 + $0xe8] sm:$0xff] %vm1310, %v2402
      %2435 = vst.msk [vmem:[%s154 + $0xf0] sm:$0xff] %vm1310, %v2403
      %2436 = vst.msk [vmem:[%s154 + $0xf8] sm:$0xff] %vm1310, %v2404
      %s2437 = smul.u32 32, %s17
      %p2438 = scmp.lt.s32.totalorder %s16, 1
      %s2439 = scalar_select %p2438, %s16, 1
      %p2440 = scmp.lt.s32.totalorder %s2437, 31
      %s2441 = scalar_select %p2440, %s2437, 31
      %s2442 = smul.addr %s2439, 32
      %s2443 = sadd.s32 %s2441, %s2442
      %s2444 = smul.addr %s2443, 8
      %s2445 = scalar_lea.vmem %s1, %s2444
      // Predicated region
      $region25: #{tpu_custom_call.1} parent=23 // pred_check
        %p2446 = pneg %p72
      $region26: #{tpu_custom_call.1} parent=23 // pred_check_branch
        %2448 = sbr.rel (%p2446) target = $region28
      $region27: #{tpu_custom_call.1} parent=23 // pred_region
        %s2449 = smul.u32 32, %s17
      $region28: #{tpu_custom_call.1} parent=23 // pred_fallthru
        _
    $region24: #{tpu_custom_call.1} parent=5 // pred_fallthru
      _
    %p2450 = scmp.le.s32.totalorder 2, %s7
    // Predicated region
    $region29: #{tpu_custom_call.1} parent=5 // pred_check
      %p2451 = pneg %p2450
    $region30: #{tpu_custom_call.1} parent=5 // pred_check_branch
      %2453 = sbr.rel (%p2451) target = $region32
    $region31: #{tpu_custom_call.1} parent=5 // pred_region
      %s2454 = ssub.s32 %s7, 2
      // Predicated region
      $region33: #{tpu_custom_call.1} parent=31 // pred_check
        %p2455 = pneg %p78
      $region34: #{tpu_custom_call.1} parent=31 // pred_check_branch
        %2457 = sbr.rel (%p2455) target = $region36
      $region35: #{tpu_custom_call.1} parent=31 // pred_region
        %s2458 = smul.u32 32, %s19
        %p2459 = scmp.lt.s32.totalorder %s18, 1
        %s2460 = scalar_select %p2459, %s18, 1
        %p2461 = scmp.lt.s32.totalorder %s2458, 31
        %s2462 = scalar_select %p2461, %s2458, 31
        %s2463 = smul.addr %s2460, 32
        %s2464 = sadd.s32 %s2462, %s2463
        %s2465 = smul.addr %s2464, 8
        %s2466 = scalar_lea.vmem %s1, %s2465
      $region36: #{tpu_custom_call.1} parent=31 // pred_fallthru
        _
    $region32: #{tpu_custom_call.1} parent=5 // pred_fallthru
      _
  $region6: #{tpu_custom_call.1} parent=0 // loop_footer
    %s11 = sadd.s32 1, %s7
  $region7: #{tpu_custom_call.1} parent=0 // loop_footer_branch
    %6 = sbr.rel target = $region3
  $region8: #{tpu_custom_call.1} parent=0 // loop_exit
    _

</llo_original>
